<compile_context>
chip_gen: v6e
topology: v6e:2x2x1
jax: 0.10.0
libtpu: 0.0.40
codegen_flags: <defaults>
</compile_context>

<pallas_src>
import math

import jax
import jax.numpy as jnp
from jax import lax
from jax.experimental import pallas as pl
from jax.experimental.pallas import tpu as pltpu


# ----------------------------------------------------------------------------
# Helpers
# ----------------------------------------------------------------------------
def _round_up(x, m):
    return ((x + m - 1) // m) * m


def _layernorm(x, w, b, eps=1e-5):
    mu = jnp.mean(x, axis=-1, keepdims=True)
    var = jnp.mean((x - mu) ** 2, axis=-1, keepdims=True)
    return (x - mu) * lax.rsqrt(var + eps) * w + b


def make_positional_encoding(max_len, d_model):
    position = jnp.arange(max_len, dtype=jnp.float32)[:, None]
    div_term = jnp.exp(jnp.arange(0, d_model, 2, dtype=jnp.float32)
                       * (-math.log(10000.0) / d_model))
    ang = position * div_term
    pe = jnp.zeros((max_len, d_model), jnp.float32)
    pe = pe.at[:, 0::2].set(jnp.sin(ang))
    pe = pe.at[:, 1::2].set(jnp.cos(ang))
    return pe


def _vmem_limit_bytes():
    cap = 128 * 1024 * 1024
    try:
        cap = int(getattr(pltpu.get_tpu_info(), "vmem_capacity_bytes", cap))
    except Exception:
        pass
    # ~3/4 of the per-core VMEM: ~96 MiB on v5e/v6e, ~48 MiB on v7x.
    return max(32 * 1024 * 1024, min((cap * 3) // 4, 100 * 1024 * 1024))


# ----------------------------------------------------------------------------
# Fused encoder kernel (grid = (batch_blocks, layers))
# ----------------------------------------------------------------------------
def _make_encoder_kernel(*, num_heads, head_dim, d_model, seq_pad, seq_real,
                         block_batch, emb_scale, activation,
                         has_in_proj, has_out_proj, has_mask, arg_names):
    H, hd, D = num_heads, head_dim, d_model
    Bt, S = block_batch, seq_pad
    BS = Bt * S

    if activation == "relu":
        def act_fn(t):
            return jnp.maximum(t, jnp.zeros_like(t))          # bf16 on the VPU
    elif activation == "gelu":
        def act_fn(t):
            return jax.nn.gelu(t.astype(jnp.float32), approximate=False)
    else:
        raise KeyError("Activation should be one of ['relu', 'gelu'], "
                       "not {}.".format(activation))

    n_in = len(arg_names)

    def kernel(*refs):
        r = dict(zip(arg_names, refs[:n_in]))
        out_ref = refs[n_in]
        act_ref = refs[n_in + 1]

        l = pl.program_id(1)
        num_l = pl.num_programs(1)

        # ---- first layer step: scale + (optional) input proj + pos. encoding ----
        @pl.when(l == 0)
        def _init():
            emb = r["emb"][...]                                      # (Bt, S, IN) f32
            if has_in_proj:
                # sqrt(d_model) folded into w_in at pack time
                x0 = jnp.dot(emb.reshape(BS, -1).astype(jnp.bfloat16),
                             r["w_in"][...],
                             preferred_element_type=jnp.float32)     # (BS, D)
            else:
                x0 = emb.reshape(BS, D) * emb_scale
            x0 = x0.reshape(Bt, S, D) + r["pe"][...][None, :, :]
            act_ref[...] = x0.reshape(BS, D)

        x = act_ref[...]                                             # (BS, D) f32
        x16 = x.astype(jnp.bfloat16)

        # ---- multi-head self-attention -------------------------------------
        # Fused, lane-dense QKV projection: one (BS, D) x (D, 3D) MXU pass.
        qkv = jnp.dot(x16, r["wqkv"][0],
                      preferred_element_type=jnp.float32) + r["bqkv"][0]  # (BS, 3D)

        def heads(base):
            # (H*Bt, S, hd) head-batched view; only lane slices + leading-axis
            # stack (S is a multiple of 8, so all reshapes are tile-preserving).
            return jnp.stack(
                [qkv[:, base + h * hd: base + (h + 1) * hd].reshape(Bt, S, hd)
                 for h in range(H)], axis=0
            ).reshape(H * Bt, S, hd).astype(jnp.bfloat16)

        q = heads(0)                 # 1/sqrt(head_dim) folded into Q weights/bias
        k = heads(D)
        v = heads(2 * D)

        # scores: einsum('bqd,bkd->bqk') batched over (head, sample)
        s = lax.dot_general(q, k, (((2,), (2,)), ((0,), (0,))),
                            preferred_element_type=jnp.float32)      # (H*Bt, S, S)
        s = s.reshape(H, Bt, S, S)
        if has_mask:
            s = s + r["kb"][...][None, :, :, :]     # additive key bias (0 / -1e9)
        s = s - jnp.max(s, axis=-1, keepdims=True)
        e = jnp.exp(s)
        p_attn = e * pl.reciprocal(jnp.sum(e, axis=-1, keepdims=True), approx=True)
        p_attn = p_attn.reshape(H * Bt, S, S).astype(jnp.bfloat16)

        # context: einsum('bqk,bkd->bqd')
        ctx = lax.dot_general(p_attn, v, (((2,), (1,)), ((0,), (0,))),
                              preferred_element_type=jnp.float32)    # (H*Bt, S, hd)

        # fold heads back onto the lane axis -> single (BS, D) x (D, D) out proj
        ctx_h = ctx.reshape(H, BS, hd).astype(jnp.bfloat16)
        ctx_cat = jnp.concatenate([ctx_h[h] for h in range(H)], axis=-1)   # (BS, D)
        a1 = jnp.dot(ctx_cat, r["wo"][0],
                     preferred_element_type=jnp.float32) + r["bo"][0]      # (BS, D)

        # residual + branch-layernorm exactly as the module: src + norm1(attn)
        src2 = x + _layernorm(a1, r["ln1w"][0], r["ln1b"][0])

        # ---- feed-forward (hidden kept in bf16) -----------------------------
        h1 = jnp.dot(src2.astype(jnp.bfloat16), r["w1"][0],
                     preferred_element_type=jnp.float32) + r["b1"][0]
        h1 = act_fn(h1.astype(jnp.bfloat16)).astype(jnp.bfloat16)
        a2 = jnp.dot(h1, r["w2"][0],
                     preferred_element_type=jnp.float32) + r["b2"][0]
        new_x = src2 + _layernorm(a2, r["ln2w"][0], r["ln2b"][0])
        act_ref[...] = new_x

        # ---- last layer step: sequence mean (real positions) + output proj ----
        @pl.when(l == num_l - 1)
        def _finalize():
            xm = jnp.sum(new_x.reshape(Bt, S, D)[:, :seq_real, :], axis=1) \
                 * (1.0 / seq_real)                                   # (Bt, D)
            if has_out_proj:
                # mean(x) @ W == mean(x @ W)  (output layer has no bias)
                y = jnp.dot(xm.astype(jnp.bfloat16), r["w_out"][...],
                            preferred_element_type=jnp.float32)       # (Bt, OUTp)
            else:
                y = xm
            out_ref[0] = y

    return kernel


# ----------------------------------------------------------------------------
# Parameter init (PyTorch-like layout, f32) and packing to kernel layout
# ----------------------------------------------------------------------------
def _xavier(key, shape):
    fan_in, fan_out = shape[0], shape[1]
    a = math.sqrt(6.0 / (fan_in + fan_out))
    return jax.random.uniform(key, shape, jnp.float32, -a, a)


def init_params(key, input_dim, output_dim, *, d_model, num_heads,
                dim_feedforward, num_layers):
    params = {"layers": []}
    keys = jax.random.split(key, num_layers + 2)
    if input_dim != d_model:
        params["w_in"] = _xavier(keys[0], (input_dim, d_model))
    if output_dim != d_model:
        params["w_out"] = _xavier(keys[1], (d_model, output_dim))
    for i in range(num_layers):
        lk = jax.random.split(keys[2 + i], 4)
        params["layers"].append({
            "wqkv": _xavier(lk[0], (d_model, 3 * d_model)),   # x @ wqkv -> [q|k|v]
            "bqkv": jnp.zeros((1, 3 * d_model), jnp.float32),
            "wo": _xavier(lk[1], (d_model, d_model)),         # concat(heads) @ wo
            "bo": jnp.zeros((1, d_model), jnp.float32),
            "ln1_w": jnp.ones((1, d_model), jnp.float32),
            "ln1_b": jnp.zeros((1, d_model), jnp.float32),
            "w1": _xavier(lk[2], (d_model, dim_feedforward)),
            "b1": jnp.zeros((1, dim_feedforward), jnp.float32),
            "w2": _xavier(lk[3], (dim_feedforward, d_model)),
            "b2": jnp.zeros((1, d_model), jnp.float32),
            "ln2_w": jnp.ones((1, d_model), jnp.float32),
            "ln2_b": jnp.zeros((1, d_model), jnp.float32),
        })
    return params


def _pack_params(params, *, d_model, num_heads, dim_feedforward, emb_scale):
    """Stack per-layer params along a leading L axis, keep fused (D,3D)/(D,D)
    attention layouts, fold scales, zero-pad FFN/output lane dims, cast matmul
    weights to bf16."""
    layers = params["layers"]
    D, H, F = d_model, num_heads, dim_feedforward
    hd = D // H
    F_pad = _round_up(F, 128)
    q_scale = 1.0 / math.sqrt(hd)

    def stack(name):
        return jnp.stack([lp[name] for lp in layers], axis=0)

    wqkv = stack("wqkv")                         # (L, D, 3D); head h = cols h*hd:(h+1)*hd
    bqkv = stack("bqkv")                         # (L, 1, 3D)
    # fold 1/sqrt(head_dim) into the Q columns (weights AND bias)
    wqkv = wqkv.at[:, :, :D].multiply(q_scale)
    bqkv = bqkv.at[:, :, :D].multiply(q_scale)

    w1, b1, w2 = stack("w1"), stack("b1"), stack("w2")
    if F_pad != F:                               # exact-math zero padding to lane multiple
        w1 = jnp.pad(w1, ((0, 0), (0, 0), (0, F_pad - F)))
        b1 = jnp.pad(b1, ((0, 0), (0, 0), (0, F_pad - F)))
        w2 = jnp.pad(w2, ((0, 0), (0, F_pad - F), (0, 0)))

    packed = {
        "wqkv": wqkv.astype(jnp.bfloat16),
        "bqkv": bqkv.astype(jnp.float32),
        "wo": stack("wo").astype(jnp.bfloat16),             # (L, D, D)
        "bo": stack("bo").astype(jnp.float32),               # (L, 1, D)
        "ln1w": stack("ln1_w"), "ln1b": stack("ln1_b"),
        "w1": w1.astype(jnp.bfloat16), "b1": b1.astype(jnp.float32),
        "w2": w2.astype(jnp.bfloat16), "b2": stack("b2").astype(jnp.float32),
        "ln2w": stack("ln2_w"), "ln2b": stack("ln2_b"),
    }
    if "w_in" in params:        # fold sqrt(d_model) embedding scale into w_in
        packed["w_in"] = (params["w_in"] * emb_scale).astype(jnp.bfloat16)
    if "w_out" in params:
        w_out = params["w_out"]
        out_pad = _round_up(w_out.shape[1], 128)
        if out_pad != w_out.shape[1]:
            w_out = jnp.pad(w_out, ((0, 0), (0, out_pad - w_out.shape[1])))
        packed["w_out"] = w_out.astype(jnp.bfloat16)
    return packed


# ----------------------------------------------------------------------------
# Full TransformerEncoder forward (single fused pallas_call)
# ----------------------------------------------------------------------------
def transformer_encoder_forward(params, embeddings, mask=None, *,
                                d_model, num_heads, dim_feedforward, num_layers,
                                activation="relu", block_batch=8):
    # embeddings: (B, S, input_dim); mask: optional (B, S) bool, True = valid token.
    B, S, input_dim = embeddings.shape
    D, H, L = d_model, num_heads, num_layers
    assert D % H == 0
    hd = D // H
    has_in_proj = "w_in" in params
    has_out_proj = "w_out" in params
    if not has_in_proj:
        assert input_dim == D
    OUT = params["w_out"].shape[1] if has_out_proj else D

    p = _pack_params(params, d_model=D, num_heads=H,
                     dim_feedforward=dim_feedforward, emb_scale=float(D) ** 0.5)
    IN = p["w_in"].shape[0] if has_in_proj else D
    assert IN == input_dim
    F_pad = p["w1"].shape[2]
    OUT_lane = p["w_out"].shape[1] if has_out_proj else D

    # ---- batch blocking + sublane/lane padding ----
    S_pad = _round_up(S, 8)
    Bt = max(1, min(block_batch, B))
    while Bt > 1 and (B + Bt - 1) // Bt < 2:   # keep >=2 blocks on the parallel axis
        Bt = max(1, Bt // 2)
    B_pad = _round_up(B, Bt)
    nb = B_pad // Bt

    emb = embeddings.astype(jnp.float32)
    if (B_pad, S_pad) != (B, S):
        emb = jnp.pad(emb, ((0, B_pad - B), (0, S_pad - S), (0, 0)))
    need_mask = (mask is not None) or (S_pad != S)

    pe = make_positional_encoding(S_pad, D)

    # ---- build kernel arguments / specs ----
    arg_names, inputs, in_specs = [], [], []

    def add(name, arr, spec):
        arg_names.append(name)
        inputs.append(arr)
        in_specs.append(spec)

    add("emb", emb, pl.BlockSpec((Bt, S_pad, IN), lambda b, l: (b, 0, 0)))
    add("pe", pe, pl.BlockSpec((S_pad, D), lambda b, l: (0, 0)))
    if need_mask:
        valid = jnp.ones((B, S), dtype=bool) if mask is None else mask.astype(bool)
        valid = jnp.pad(valid, ((0, B_pad - B), (0, S_pad - S)), constant_values=False)
        # Finite -1e9 (not -inf) so a fully masked row cannot NaN the softmax.
        kbias = jnp.where(valid, 0.0, -1e9).astype(jnp.float32).reshape(B_pad, 1, S_pad)
        add("kb", kbias, pl.BlockSpec((Bt, 1, S_pad), lambda b, l: (b, 0, 0)))
    if has_in_proj:
        add("w_in", p["w_in"], pl.BlockSpec((IN, D), lambda b, l: (0, 0)))

    wmap3 = lambda b, l: (l, 0, 0)
    layer_blocks = {
        "wqkv": (1, D, 3 * D), "bqkv": (1, 1, 3 * D),
        "wo": (1, D, D), "bo": (1, 1, D),
        "ln1w": (1, 1, D), "ln1b": (1, 1, D),
        "w1": (1, D, F_pad), "b1": (1, 1, F_pad),
        "w2": (1, F_pad, D), "b2": (1, 1, D),
        "ln2w": (1, 1, D), "ln2b": (1, 1, D),
    }
    for name, blk in layer_blocks.items():
        add(name, p[name], pl.BlockSpec(blk, wmap3))
    if has_out_proj:
        add("w_out", p["w_out"], pl.BlockSpec((D, OUT_lane), lambda b, l: (0, 0)))

    kernel = _make_encoder_kernel(
        num_heads=H, head_dim=hd, d_model=D, seq_pad=S_pad, seq_real=S,
        block_batch=Bt, emb_scale=float(D) ** 0.5, activation=activation,
        has_in_proj=has_in_proj, has_out_proj=has_out_proj, has_mask=need_mask,
        arg_names=tuple(arg_names))

    # advisory cost estimate for the XLA scheduler
    flops = B_pad * L * (2 * S_pad * D * (4 * D + 2 * F_pad) + 4 * S_pad * S_pad * D)
    if has_in_proj:
        flops += 2 * B_pad * S_pad * IN * D
    if has_out_proj:
        flops += 2 * B_pad * D * OUT_lane
    weight_bytes = 2 * L * (3 * D * D + D * D + 2 * D * F_pad) + 4 * L * (10 * D + 2 * F_pad)
    bytes_accessed = nb * weight_bytes + emb.size * 4 + B_pad * OUT_lane * 4
    cost = pl.CostEstimate(flops=int(flops),
                           transcendentals=int(B_pad * L * H * S_pad * S_pad),
                           bytes_accessed=int(bytes_accessed))

    out = pl.pallas_call(
        kernel,
        out_shape=jax.ShapeDtypeStruct((nb, Bt, OUT_lane), jnp.float32),
        grid=(nb, L),
        in_specs=in_specs,
        out_specs=pl.BlockSpec((1, Bt, OUT_lane), lambda b, l: (b, 0, 0)),
        scratch_shapes=[pltpu.VMEM((Bt * S_pad, D), jnp.float32)],   # resident activation
        compiler_params=pltpu.CompilerParams(
            dimension_semantics=("parallel", "arbitrary"),
            vmem_limit_bytes=_vmem_limit_bytes()),
        cost_estimate=cost,
    )(*inputs)

    # TODO(synk): d_model itself is not padded to a lane multiple (would change
    # LayerNorm statistics); only S / FFN / output dims are padded.
    return out.reshape(B_pad, OUT_lane)[:B, :OUT]                    # (B, OUT)


# ----------------------------------------------------------------------------
if __name__ == "__main__":
    B, S = 2, 8
    INPUT_DIM, OUTPUT_DIM = 16, 8
    CFG = dict(d_model=32, num_heads=4, dim_feedforward=64, num_layers=2)

    key = jax.random.PRNGKey(0)
    k_emb, k_par = jax.random.split(key)
    embeddings = jax.random.normal(k_emb, (B, S, INPUT_DIM), jnp.float32)
    params = init_params(k_par, INPUT_DIM, OUTPUT_DIM, **CFG)

    # mask: True = valid token; pad the last two positions of sample 1.
    mask = jnp.ones((B, S), dtype=bool).at[1, S - 2:].set(False)

    # TODO(synk): dropout layers are treated as identity (eval mode), matching inference.
    out = transformer_encoder_forward(params, embeddings, mask=mask, **CFG)
    jax.block_until_ready(out)
    assert out.shape == (B, OUTPUT_DIM) and out.dtype == jnp.float32
    assert bool(jnp.all(jnp.isfinite(out)))
    print("KERNEL_OK")
</pallas_src>

<mosaic_0001>
module attributes {stable_mosaic.version = 11 : i64} {
  func.func @kernel(%arg0: i32, %arg1: i32, %arg2: memref<1x8x16xf32, #tpu.memory_space<vmem>>, %arg3: memref<8x32xf32, #tpu.memory_space<vmem>>, %arg4: memref<1x1x8xf32, #tpu.memory_space<vmem>>, %arg5: memref<16x32xbf16, #tpu.memory_space<vmem>>, %arg6: memref<1x32x96xbf16, #tpu.memory_space<vmem>>, %arg7: memref<1x1x96xf32, #tpu.memory_space<vmem>>, %arg8: memref<1x32x32xbf16, #tpu.memory_space<vmem>>, %arg9: memref<1x1x32xf32, #tpu.memory_space<vmem>>, %arg10: memref<1x1x32xf32, #tpu.memory_space<vmem>>, %arg11: memref<1x1x32xf32, #tpu.memory_space<vmem>>, %arg12: memref<1x32x128xbf16, #tpu.memory_space<vmem>>, %arg13: memref<1x1x128xf32, #tpu.memory_space<vmem>>, %arg14: memref<1x128x32xbf16, #tpu.memory_space<vmem>>, %arg15: memref<1x1x32xf32, #tpu.memory_space<vmem>>, %arg16: memref<1x1x32xf32, #tpu.memory_space<vmem>>, %arg17: memref<1x1x32xf32, #tpu.memory_space<vmem>>, %arg18: memref<32x128xbf16, #tpu.memory_space<vmem>>, %arg19: memref<1x1x128xf32, #tpu.memory_space<vmem>>, %arg20: memref<8x32xf32, #tpu.memory_space<vmem>>) attributes {dimension_semantics = [#tpu.dimension_semantics<parallel>, #tpu.dimension_semantics<arbitrary>], iteration_bounds = array<i64: 2, 2>, scalar_prefetch = 0 : i64, scratch_operands = 1 : i64, tpu.core_type = #tpu.core_type<tc>, window_params = [{transform_indices = @transform_0, window_bounds = array<i64: 1, 8, 16>}, {pipeline_mode = #tpu.pipeline_mode<synchronous>, transform_indices = @transform_1, window_bounds = array<i64: 8, 32>}, {transform_indices = @transform_2, window_bounds = array<i64: 1, 1, 8>}, {pipeline_mode = #tpu.pipeline_mode<synchronous>, transform_indices = @transform_3, window_bounds = array<i64: 16, 32>}, {transform_indices = @transform_4, window_bounds = array<i64: 1, 32, 96>}, {transform_indices = @transform_5, window_bounds = array<i64: 1, 1, 96>}, {transform_indices = @transform_6, window_bounds = array<i64: 1, 32, 32>}, {transform_indices = @transform_7, window_bounds = array<i64: 1, 1, 32>}, {transform_indices = @transform_8, window_bounds = array<i64: 1, 1, 32>}, {transform_indices = @transform_9, window_bounds = array<i64: 1, 1, 32>}, {transform_indices = @transform_10, window_bounds = array<i64: 1, 32, 128>}, {transform_indices = @transform_11, window_bounds = array<i64: 1, 1, 128>}, {transform_indices = @transform_12, window_bounds = array<i64: 1, 128, 32>}, {transform_indices = @transform_13, window_bounds = array<i64: 1, 1, 32>}, {transform_indices = @transform_14, window_bounds = array<i64: 1, 1, 32>}, {transform_indices = @transform_15, window_bounds = array<i64: 1, 1, 32>}, {pipeline_mode = #tpu.pipeline_mode<synchronous>, transform_indices = @transform_16, window_bounds = array<i64: 32, 128>}, {transform_indices = @transform_17, window_bounds = array<i64: 1, 1, 128>}]} {
    %c0_i32 = arith.constant 0 : i32
    %0 = arith.cmpi eq, %arg1, %c0_i32 : i32
    %1 = arith.extui %0 : i1 to i32
    %c0_i32_0 = arith.constant 0 : i32
    %2 = arith.cmpi ne, %1, %c0_i32_0 : i32
    scf.if %2 {
      %c0_62 = arith.constant 0 : index
      %c0_63 = arith.constant 0 : index
      %c0_64 = arith.constant 0 : index
      %169 = vector.load %arg2[%c0_62, %c0_63, %c0_64] : memref<1x8x16xf32, #tpu.memory_space<vmem>>, vector<1x8x16xf32>
      %170 = vector.shape_cast %169 : vector<1x8x16xf32> to vector<8x16xf32>
      %171 = arith.truncf %170 : vector<8x16xf32> to vector<8x16xbf16>
      %c0_65 = arith.constant 0 : index
      %c0_66 = arith.constant 0 : index
      %172 = vector.load %arg5[%c0_65, %c0_66] : memref<16x32xbf16, #tpu.memory_space<vmem>>, vector<16x32xbf16>
      %cst_67 = arith.constant dense<0.000000e+00> : vector<8x32xf32>
      %173 = tpu.matmul %171, %172, %cst_67 {dimension_numbers = #tpu.dot_dimension_numbers<[1], [0], [0], [1], [0, 0, 1, 1], [], []>} : vector<8x16xbf16>, vector<16x32xbf16>, vector<8x32xf32> -> vector<8x32xf32>
      %174 = vector.shape_cast %173 : vector<8x32xf32> to vector<1x8x32xf32>
      %c0_68 = arith.constant 0 : index
      %c0_69 = arith.constant 0 : index
      %175 = vector.load %arg3[%c0_68, %c0_69] : memref<8x32xf32, #tpu.memory_space<vmem>>, vector<8x32xf32>
      %176 = vector.shape_cast %175 : vector<8x32xf32> to vector<1x8x32xf32>
      %177 = arith.addf %174, %176 : vector<1x8x32xf32>
      %178 = vector.shape_cast %177 : vector<1x8x32xf32> to vector<8x32xf32>
      %c0_70 = arith.constant 0 : index
      %c0_71 = arith.constant 0 : index
      %179 = vector.load %arg20[%c0_70, %c0_71] : memref<8x32xf32, #tpu.memory_space<vmem>>, vector<8x32xf32>
      tpu.vector_store %arg20[%c0_70, %c0_71], %178 {strides = array<i32>} : memref<8x32xf32, #tpu.memory_space<vmem>>, vector<8x32xf32>,
    } else {
    }
    %c0 = arith.constant 0 : index
    %c0_1 = arith.constant 0 : index
    %3 = vector.load %arg20[%c0, %c0_1] : memref<8x32xf32, #tpu.memory_space<vmem>>, vector<8x32xf32>
    %4 = arith.truncf %3 : vector<8x32xf32> to vector<8x32xbf16>
    %c0_2 = arith.constant 0 : index
    %c0_3 = arith.constant 0 : index
    %c0_4 = arith.constant 0 : index
    %5 = vector.load %arg6[%c0_2, %c0_3, %c0_4] : memref<1x32x96xbf16, #tpu.memory_space<vmem>>, vector<1x32x96xbf16>
    %6 = vector.shape_cast %5 : vector<1x32x96xbf16> to vector<32x96xbf16>
    %cst = arith.constant dense<0.000000e+00> : vector<8x96xf32>
    %7 = tpu.matmul %4, %6, %cst {dimension_numbers = #tpu.dot_dimension_numbers<[1], [0], [0], [1], [0, 0, 1, 1], [], []>} : vector<8x32xbf16>, vector<32x96xbf16>, vector<8x96xf32> -> vector<8x96xf32>
    %c0_5 = arith.constant 0 : index
    %c0_6 = arith.constant 0 : index
    %c0_7 = arith.constant 0 : index
    %8 = vector.load %arg7[%c0_5, %c0_6, %c0_7] : memref<1x1x96xf32, #tpu.memory_space<vmem>>, vector<1x1x96xf32>
    %9 = vector.shape_cast %8 : vector<1x1x96xf32> to vector<1x96xf32>
    %10 = vector.broadcast %9 : vector<1x96xf32> to vector<8x96xf32>
    %11 = arith.addf %7, %10 : vector<8x96xf32>
    %12 = vector.extract_strided_slice %11 {offsets = [0, 0], sizes = [8, 8], strides = [1, 1]} : vector<8x96xf32> to vector<8x8xf32>
    %13 = vector.shape_cast %12 : vector<8x8xf32> to vector<1x8x8xf32>
    %14 = vector.extract_strided_slice %11 {offsets = [0, 8], sizes = [8, 8], strides = [1, 1]} : vector<8x96xf32> to vector<8x8xf32>
    %15 = vector.shape_cast %14 : vector<8x8xf32> to vector<1x8x8xf32>
    %16 = vector.extract_strided_slice %11 {offsets = [0, 16], sizes = [8, 8], strides = [1, 1]} : vector<8x96xf32> to vector<8x8xf32>
    %17 = vector.shape_cast %16 : vector<8x8xf32> to vector<1x8x8xf32>
    %18 = vector.extract_strided_slice %11 {offsets = [0, 24], sizes = [8, 8], strides = [1, 1]} : vector<8x96xf32> to vector<8x8xf32>
    %19 = vector.shape_cast %18 : vector<8x8xf32> to vector<1x8x8xf32>
    %20 = vector.shape_cast %13 : vector<1x8x8xf32> to vector<1x1x8x8xf32>
    %21 = vector.shape_cast %15 : vector<1x8x8xf32> to vector<1x1x8x8xf32>
    %22 = vector.shape_cast %17 : vector<1x8x8xf32> to vector<1x1x8x8xf32>
    %23 = vector.shape_cast %19 : vector<1x8x8xf32> to vector<1x1x8x8xf32>
    %24 = tpu.concatenate %20, %21, %22, %23 in 0 : vector<1x1x8x8xf32>, vector<1x1x8x8xf32>, vector<1x1x8x8xf32>, vector<1x1x8x8xf32> -> vector<4x1x8x8xf32>
    %25 = vector.shape_cast %24 : vector<4x1x8x8xf32> to vector<4x8x8xf32>
    %26 = arith.truncf %25 : vector<4x8x8xf32> to vector<4x8x8xbf16>
    %27 = vector.extract_strided_slice %11 {offsets = [0, 32], sizes = [8, 8], strides = [1, 1]} : vector<8x96xf32> to vector<8x8xf32>
    %28 = vector.shape_cast %27 : vector<8x8xf32> to vector<1x8x8xf32>
    %29 = vector.extract_strided_slice %11 {offsets = [0, 40], sizes = [8, 8], strides = [1, 1]} : vector<8x96xf32> to vector<8x8xf32>
    %30 = vector.shape_cast %29 : vector<8x8xf32> to vector<1x8x8xf32>
    %31 = vector.extract_strided_slice %11 {offsets = [0, 48], sizes = [8, 8], strides = [1, 1]} : vector<8x96xf32> to vector<8x8xf32>
    %32 = vector.shape_cast %31 : vector<8x8xf32> to vector<1x8x8xf32>
    %33 = vector.extract_strided_slice %11 {offsets = [0, 56], sizes = [8, 8], strides = [1, 1]} : vector<8x96xf32> to vector<8x8xf32>
    %34 = vector.shape_cast %33 : vector<8x8xf32> to vector<1x8x8xf32>
    %35 = vector.shape_cast %28 : vector<1x8x8xf32> to vector<1x1x8x8xf32>
    %36 = vector.shape_cast %30 : vector<1x8x8xf32> to vector<1x1x8x8xf32>
    %37 = vector.shape_cast %32 : vector<1x8x8xf32> to vector<1x1x8x8xf32>
    %38 = vector.shape_cast %34 : vector<1x8x8xf32> to vector<1x1x8x8xf32>
    %39 = tpu.concatenate %35, %36, %37, %38 in 0 : vector<1x1x8x8xf32>, vector<1x1x8x8xf32>, vector<1x1x8x8xf32>, vector<1x1x8x8xf32> -> vector<4x1x8x8xf32>
    %40 = vector.shape_cast %39 : vector<4x1x8x8xf32> to vector<4x8x8xf32>
    %41 = arith.truncf %40 : vector<4x8x8xf32> to vector<4x8x8xbf16>
    %42 = vector.extract_strided_slice %11 {offsets = [0, 64], sizes = [8, 8], strides = [1, 1]} : vector<8x96xf32> to vector<8x8xf32>
    %43 = vector.shape_cast %42 : vector<8x8xf32> to vector<1x8x8xf32>
    %44 = vector.extract_strided_slice %11 {offsets = [0, 72], sizes = [8, 8], strides = [1, 1]} : vector<8x96xf32> to vector<8x8xf32>
    %45 = vector.shape_cast %44 : vector<8x8xf32> to vector<1x8x8xf32>
    %46 = vector.extract_strided_slice %11 {offsets = [0, 80], sizes = [8, 8], strides = [1, 1]} : vector<8x96xf32> to vector<8x8xf32>
    %47 = vector.shape_cast %46 : vector<8x8xf32> to vector<1x8x8xf32>
    %48 = vector.extract_strided_slice %11 {offsets = [0, 88], sizes = [8, 8], strides = [1, 1]} : vector<8x96xf32> to vector<8x8xf32>
    %49 = vector.shape_cast %48 : vector<8x8xf32> to vector<1x8x8xf32>
    %50 = vector.shape_cast %43 : vector<1x8x8xf32> to vector<1x1x8x8xf32>
    %51 = vector.shape_cast %45 : vector<1x8x8xf32> to vector<1x1x8x8xf32>
    %52 = vector.shape_cast %47 : vector<1x8x8xf32> to vector<1x1x8x8xf32>
    %53 = vector.shape_cast %49 : vector<1x8x8xf32> to vector<1x1x8x8xf32>
    %54 = tpu.concatenate %50, %51, %52, %53 in 0 : vector<1x1x8x8xf32>, vector<1x1x8x8xf32>, vector<1x1x8x8xf32>, vector<1x1x8x8xf32> -> vector<4x1x8x8xf32>
    %55 = vector.shape_cast %54 : vector<4x1x8x8xf32> to vector<4x8x8xf32>
    %56 = arith.truncf %55 : vector<4x8x8xf32> to vector<4x8x8xbf16>
    %cst_8 = arith.constant dense<0.000000e+00> : vector<4x8x8xf32>
    %57 = tpu.matmul %26, %41, %cst_8 {dimension_numbers = #tpu.dot_dimension_numbers<[2], [2], [1], [1], [0, 0, 0, 1, 1, 1], [0], [0]>} : vector<4x8x8xbf16>, vector<4x8x8xbf16>, vector<4x8x8xf32> -> vector<4x8x8xf32>
    %58 = vector.shape_cast %57 : vector<4x8x8xf32> to vector<4x1x8x8xf32>
    %c0_9 = arith.constant 0 : index
    %c0_10 = arith.constant 0 : index
    %c0_11 = arith.constant 0 : index
    %59 = vector.load %arg4[%c0_9, %c0_10, %c0_11] : memref<1x1x8xf32, #tpu.memory_space<vmem>>, vector<1x1x8xf32>
    %60 = vector.shape_cast %59 : vector<1x1x8xf32> to vector<1x1x1x8xf32>
    %61 = vector.broadcast %60 : vector<1x1x1x8xf32> to vector<4x1x8x8xf32>
    %62 = arith.addf %58, %61 : vector<4x1x8x8xf32>
    %cst_12 = arith.constant dense<0xFF800000> : vector<4x1x8xf32>
    %63 = vector.multi_reduction <maximumf>, %62, %cst_12 [3] : vector<4x1x8x8xf32> to vector<4x1x8xf32>
    %64 = vector.shape_cast %63 : vector<4x1x8xf32> to vector<4x1x8x1xf32>
    %65 = vector.broadcast %64 : vector<4x1x8x1xf32> to vector<4x1x8x8xf32>
    %66 = arith.subf %62, %65 : vector<4x1x8x8xf32>
    %67 = math.exp %66 : vector<4x1x8x8xf32>
    %cst_13 = arith.constant dense<0.000000e+00> : vector<4x1x8xf32>
    %68 = vector.multi_reduction <add>, %67, %cst_13 [3] : vector<4x1x8x8xf32> to vector<4x1x8xf32>
    %69 = vector.shape_cast %68 : vector<4x1x8xf32> to vector<4x1x8x1xf32>
    %70 = tpu.reciprocal %69 {approx = true} : vector<4x1x8x1xf32> -> vector<4x1x8x1xf32>
    %71 = vector.broadcast %70 : vector<4x1x8x1xf32> to vector<4x1x8x8xf32>
    %72 = arith.mulf %67, %71 : vector<4x1x8x8xf32>
    %73 = vector.shape_cast %72 : vector<4x1x8x8xf32> to vector<4x8x8xf32>
    %74 = arith.truncf %73 : vector<4x8x8xf32> to vector<4x8x8xbf16>
    %cst_14 = arith.constant dense<0.000000e+00> : vector<4x8x8xf32>
    %75 = tpu.matmul %74, %56, %cst_14 {dimension_numbers = #tpu.dot_dimension_numbers<[2], [1], [1], [2], [0, 0, 0, 1, 1, 2], [0], [0]>} : vector<4x8x8xbf16>, vector<4x8x8xbf16>, vector<4x8x8xf32> -> vector<4x8x8xf32>
    %76 = arith.truncf %75 : vector<4x8x8xf32> to vector<4x8x8xbf16>
    %77 = vector.extract_strided_slice %76 {offsets = [0, 0, 0], sizes = [1, 8, 8], strides = [1, 1, 1]} : vector<4x8x8xbf16> to vector<1x8x8xbf16>
    %78 = vector.shape_cast %77 : vector<1x8x8xbf16> to vector<8x8xbf16>
    %79 = vector.extract_strided_slice %76 {offsets = [1, 0, 0], sizes = [1, 8, 8], strides = [1, 1, 1]} : vector<4x8x8xbf16> to vector<1x8x8xbf16>
    %80 = vector.shape_cast %79 : vector<1x8x8xbf16> to vector<8x8xbf16>
    %81 = vector.extract_strided_slice %76 {offsets = [2, 0, 0], sizes = [1, 8, 8], strides = [1, 1, 1]} : vector<4x8x8xbf16> to vector<1x8x8xbf16>
    %82 = vector.shape_cast %81 : vector<1x8x8xbf16> to vector<8x8xbf16>
    %83 = vector.extract_strided_slice %76 {offsets = [3, 0, 0], sizes = [1, 8, 8], strides = [1, 1, 1]} : vector<4x8x8xbf16> to vector<1x8x8xbf16>
    %84 = vector.shape_cast %83 : vector<1x8x8xbf16> to vector<8x8xbf16>
    %85 = tpu.concatenate %78, %80, %82, %84 in 1 : vector<8x8xbf16>, vector<8x8xbf16>, vector<8x8xbf16>, vector<8x8xbf16> -> vector<8x32xbf16>
    %c0_15 = arith.constant 0 : index
    %c0_16 = arith.constant 0 : index
    %c0_17 = arith.constant 0 : index
    %86 = vector.load %arg8[%c0_15, %c0_16, %c0_17] : memref<1x32x32xbf16, #tpu.memory_space<vmem>>, vector<1x32x32xbf16>
    %87 = vector.shape_cast %86 : vector<1x32x32xbf16> to vector<32x32xbf16>
    %cst_18 = arith.constant dense<0.000000e+00> : vector<8x32xf32>
    %88 = tpu.matmul %85, %87, %cst_18 {dimension_numbers = #tpu.dot_dimension_numbers<[1], [0], [0], [1], [0, 0, 1, 1], [], []>} : vector<8x32xbf16>, vector<32x32xbf16>, vector<8x32xf32> -> vector<8x32xf32>
    %c0_19 = arith.constant 0 : index
    %c0_20 = arith.constant 0 : index
    %c0_21 = arith.constant 0 : index
    %89 = vector.load %arg9[%c0_19, %c0_20, %c0_21] : memref<1x1x32xf32, #tpu.memory_space<vmem>>, vector<1x1x32xf32>
    %90 = vector.shape_cast %89 : vector<1x1x32xf32> to vector<1x32xf32>
    %91 = vector.broadcast %90 : vector<1x32xf32> to vector<8x32xf32>
    %92 = arith.addf %88, %91 : vector<8x32xf32>
    %c0_22 = arith.constant 0 : index
    %c0_23 = arith.constant 0 : index
    %c0_24 = arith.constant 0 : index
    %93 = vector.load %arg10[%c0_22, %c0_23, %c0_24] : memref<1x1x32xf32, #tpu.memory_space<vmem>>, vector<1x1x32xf32>
    %94 = vector.shape_cast %93 : vector<1x1x32xf32> to vector<1x32xf32>
    %c0_25 = arith.constant 0 : index
    %c0_26 = arith.constant 0 : index
    %c0_27 = arith.constant 0 : index
    %95 = vector.load %arg11[%c0_25, %c0_26, %c0_27] : memref<1x1x32xf32, #tpu.memory_space<vmem>>, vector<1x1x32xf32>
    %96 = vector.shape_cast %95 : vector<1x1x32xf32> to vector<1x32xf32>
    %cst_28 = arith.constant dense<0.000000e+00> : vector<8xf32>
    %97 = vector.multi_reduction <add>, %92, %cst_28 [1] : vector<8x32xf32> to vector<8xf32>
    %98 = vector.shape_cast %97 : vector<8xf32> to vector<8x1xf32>
    %cst_29 = arith.constant 3.200000e+01 : f32
    %99 = vector.broadcast %cst_29 : f32 to vector<8x1xf32>
    %100 = arith.divf %98, %99 : vector<8x1xf32>
    %101 = vector.broadcast %100 : vector<8x1xf32> to vector<8x32xf32>
    %102 = arith.subf %92, %101 : vector<8x32xf32>
    %103 = arith.mulf %102, %102 : vector<8x32xf32>
    %cst_30 = arith.constant dense<0.000000e+00> : vector<8xf32>
    %104 = vector.multi_reduction <add>, %103, %cst_30 [1] : vector<8x32xf32> to vector<8xf32>
    %105 = vector.shape_cast %104 : vector<8xf32> to vector<8x1xf32>
    %cst_31 = arith.constant 3.200000e+01 : f32
    %106 = vector.broadcast %cst_31 : f32 to vector<8x1xf32>
    %107 = arith.divf %105, %106 : vector<8x1xf32>
    %108 = vector.broadcast %100 : vector<8x1xf32> to vector<8x32xf32>
    %109 = arith.subf %92, %108 : vector<8x32xf32>
    %cst_32 = arith.constant 9.99999974E-6 : f32
    %110 = vector.broadcast %cst_32 : f32 to vector<8x1xf32>
    %111 = arith.addf %107, %110 : vector<8x1xf32>
    %112 = math.rsqrt %111 : vector<8x1xf32>
    %113 = vector.broadcast %112 : vector<8x1xf32> to vector<8x32xf32>
    %114 = arith.mulf %109, %113 : vector<8x32xf32>
    %115 = vector.broadcast %94 : vector<1x32xf32> to vector<8x32xf32>
    %116 = arith.mulf %114, %115 : vector<8x32xf32>
    %117 = vector.broadcast %96 : vector<1x32xf32> to vector<8x32xf32>
    %118 = arith.addf %116, %117 : vector<8x32xf32>
    %119 = arith.addf %3, %118 : vector<8x32xf32>
    %120 = arith.truncf %119 : vector<8x32xf32> to vector<8x32xbf16>
    %c0_33 = arith.constant 0 : index
    %c0_34 = arith.constant 0 : index
    %c0_35 = arith.constant 0 : index
    %121 = vector.load %arg12[%c0_33, %c0_34, %c0_35] : memref<1x32x128xbf16, #tpu.memory_space<vmem>>, vector<1x32x128xbf16>
    %122 = vector.shape_cast %121 : vector<1x32x128xbf16> to vector<32x128xbf16>
    %cst_36 = arith.constant dense<0.000000e+00> : vector<8x128xf32>
    %123 = tpu.matmul %120, %122, %cst_36 {dimension_numbers = #tpu.dot_dimension_numbers<[1], [0], [0], [1], [0, 0, 1, 1], [], []>} : vector<8x32xbf16>, vector<32x128xbf16>, vector<8x128xf32> -> vector<8x128xf32>
    %c0_37 = arith.constant 0 : index
    %c0_38 = arith.constant 0 : index
    %c0_39 = arith.constant 0 : index
    %124 = vector.load %arg13[%c0_37, %c0_38, %c0_39] : memref<1x1x128xf32, #tpu.memory_space<vmem>>, vector<1x1x128xf32>
    %125 = vector.shape_cast %124 : vector<1x1x128xf32> to vector<1x128xf32>
    %126 = vector.broadcast %125 : vector<1x128xf32> to vector<8x128xf32>
    %127 = arith.addf %123, %126 : vector<8x128xf32>
    %128 = arith.truncf %127 : vector<8x128xf32> to vector<8x128xbf16>
    %cst_40 = arith.constant 0.000000e+00 : bf16
    %129 = vector.broadcast %cst_40 : bf16 to vector<8x128xbf16>
    %130 = arith.maximumf %128, %129 : vector<8x128xbf16>
    %c0_41 = arith.constant 0 : index
    %c0_42 = arith.constant 0 : index
    %c0_43 = arith.constant 0 : index
    %131 = vector.load %arg14[%c0_41, %c0_42, %c0_43] : memref<1x128x32xbf16, #tpu.memory_space<vmem>>, vector<1x128x32xbf16>
    %132 = vector.shape_cast %131 : vector<1x128x32xbf16> to vector<128x32xbf16>
    %cst_44 = arith.constant dense<0.000000e+00> : vector<8x32xf32>
    %133 = tpu.matmul %130, %132, %cst_44 {dimension_numbers = #tpu.dot_dimension_numbers<[1], [0], [0], [1], [0, 0, 1, 1], [], []>} : vector<8x128xbf16>, vector<128x32xbf16>, vector<8x32xf32> -> vector<8x32xf32>
    %c0_45 = arith.constant 0 : index
    %c0_46 = arith.constant 0 : index
    %c0_47 = arith.constant 0 : index
    %134 = vector.load %arg15[%c0_45, %c0_46, %c0_47] : memref<1x1x32xf32, #tpu.memory_space<vmem>>, vector<1x1x32xf32>
    %135 = vector.shape_cast %134 : vector<1x1x32xf32> to vector<1x32xf32>
    %136 = vector.broadcast %135 : vector<1x32xf32> to vector<8x32xf32>
    %137 = arith.addf %133, %136 : vector<8x32xf32>
    %c0_48 = arith.constant 0 : index
    %c0_49 = arith.constant 0 : index
    %c0_50 = arith.constant 0 : index
    %138 = vector.load %arg16[%c0_48, %c0_49, %c0_50] : memref<1x1x32xf32, #tpu.memory_space<vmem>>, vector<1x1x32xf32>
    %139 = vector.shape_cast %138 : vector<1x1x32xf32> to vector<1x32xf32>
    %c0_51 = arith.constant 0 : index
    %c0_52 = arith.constant 0 : index
    %c0_53 = arith.constant 0 : index
    %140 = vector.load %arg17[%c0_51, %c0_52, %c0_53] : memref<1x1x32xf32, #tpu.memory_space<vmem>>, vector<1x1x32xf32>
    %141 = vector.shape_cast %140 : vector<1x1x32xf32> to vector<1x32xf32>
    %cst_54 = arith.constant dense<0.000000e+00> : vector<8xf32>
    %142 = vector.multi_reduction <add>, %137, %cst_54 [1] : vector<8x32xf32> to vector<8xf32>
    %143 = vector.shape_cast %142 : vector<8xf32> to vector<8x1xf32>
    %cst_55 = arith.constant 3.200000e+01 : f32
    %144 = vector.broadcast %cst_55 : f32 to vector<8x1xf32>
    %145 = arith.divf %143, %144 : vector<8x1xf32>
    %146 = vector.broadcast %145 : vector<8x1xf32> to vector<8x32xf32>
    %147 = arith.subf %137, %146 : vector<8x32xf32>
    %148 = arith.mulf %147, %147 : vector<8x32xf32>
    %cst_56 = arith.constant dense<0.000000e+00> : vector<8xf32>
    %149 = vector.multi_reduction <add>, %148, %cst_56 [1] : vector<8x32xf32> to vector<8xf32>
    %150 = vector.shape_cast %149 : vector<8xf32> to vector<8x1xf32>
    %cst_57 = arith.constant 3.200000e+01 : f32
    %151 = vector.broadcast %cst_57 : f32 to vector<8x1xf32>
    %152 = arith.divf %150, %151 : vector<8x1xf32>
    %153 = vector.broadcast %145 : vector<8x1xf32> to vector<8x32xf32>
    %154 = arith.subf %137, %153 : vector<8x32xf32>
    %cst_58 = arith.constant 9.99999974E-6 : f32
    %155 = vector.broadcast %cst_58 : f32 to vector<8x1xf32>
    %156 = arith.addf %152, %155 : vector<8x1xf32>
    %157 = math.rsqrt %156 : vector<8x1xf32>
    %158 = vector.broadcast %157 : vector<8x1xf32> to vector<8x32xf32>
    %159 = arith.mulf %154, %158 : vector<8x32xf32>
    %160 = vector.broadcast %139 : vector<1x32xf32> to vector<8x32xf32>
    %161 = arith.mulf %159, %160 : vector<8x32xf32>
    %162 = vector.broadcast %141 : vector<1x32xf32> to vector<8x32xf32>
    %163 = arith.addf %161, %162 : vector<8x32xf32>
    %164 = arith.addf %119, %163 : vector<8x32xf32>
    %c0_59 = arith.constant 0 : index
    %c0_60 = arith.constant 0 : index
    %165 = vector.load %arg20[%c0_59, %c0_60] : memref<8x32xf32, #tpu.memory_space<vmem>>, vector<8x32xf32>
    tpu.vector_store %arg20[%c0_59, %c0_60], %164 {strides = array<i32>} : memref<8x32xf32, #tpu.memory_space<vmem>>, vector<8x32xf32>,
    %c1_i32 = arith.constant 1 : i32
    %166 = arith.cmpi eq, %arg1, %c1_i32 : i32
    %167 = arith.extui %166 : i1 to i32
    %c0_i32_61 = arith.constant 0 : i32
    %168 = arith.cmpi ne, %167, %c0_i32_61 : i32
    scf.if %168 {
      %169 = vector.shape_cast %164 : vector<8x32xf32> to vector<1x8x32xf32>
      %cst_62 = arith.constant dense<0.000000e+00> : vector<1x32xf32>
      %170 = vector.multi_reduction <add>, %169, %cst_62 [1] : vector<1x8x32xf32> to vector<1x32xf32>
      %cst_63 = arith.constant 1.250000e-01 : f32
      %171 = vector.broadcast %cst_63 : f32 to vector<1x32xf32>
      %172 = arith.mulf %170, %171 : vector<1x32xf32>
      %173 = arith.truncf %172 : vector<1x32xf32> to vector<1x32xbf16>
      %c0_64 = arith.constant 0 : index
      %c0_65 = arith.constant 0 : index
      %174 = vector.load %arg18[%c0_64, %c0_65] : memref<32x128xbf16, #tpu.memory_space<vmem>>, vector<32x128xbf16>
      %cst_66 = arith.constant dense<0.000000e+00> : vector<1x128xf32>
      %175 = tpu.matmul %173, %174, %cst_66 {dimension_numbers = #tpu.dot_dimension_numbers<[1], [0], [0], [1], [0, 0, 1, 1], [], []>} : vector<1x32xbf16>, vector<32x128xbf16>, vector<1x128xf32> -> vector<1x128xf32>
      %c0_67 = arith.constant 0 : index
      %c0_68 = arith.constant 0 : index
      %c0_69 = arith.constant 0 : index
      %176 = vector.load %arg19[%c0_67, %c0_68, %c0_69] : memref<1x1x128xf32, #tpu.memory_space<vmem>>, vector<1x1x128xf32>
      %177 = vector.shape_cast %176 : vector<1x1x128xf32> to vector<1x128xf32>
      %178 = vector.shape_cast %175 : vector<1x128xf32> to vector<1x1x128xf32>
      tpu.vector_store %arg19[%c0_67, %c0_68, %c0_69], %178 {strides = array<i32>} : memref<1x1x128xf32, #tpu.memory_space<vmem>>, vector<1x1x128xf32>,
    } else {
    }
    return
  }
  func.func @transform_0(%arg0: i32, %arg1: i32) -> (i32, i32, i32) {
    %c0_i32 = arith.constant 0 : i32
    %c0_i32_0 = arith.constant 0 : i32
    %c0_i32_1 = arith.constant 0 : i32
    return %arg0, %c0_i32, %c0_i32_0 : i32, i32, i32
  }
  func.func @transform_1(%arg0: i32, %arg1: i32) -> (i32, i32) {
    %c0_i32 = arith.constant 0 : i32
    %c0_i32_0 = arith.constant 0 : i32
    %c0_i32_1 = arith.constant 0 : i32
    return %c0_i32, %c0_i32_0 : i32, i32
  }
  func.func @transform_2(%arg0: i32, %arg1: i32) -> (i32, i32, i32) {
    %c0_i32 = arith.constant 0 : i32
    %c0_i32_0 = arith.constant 0 : i32
    %c0_i32_1 = arith.constant 0 : i32
    return %arg0, %c0_i32, %c0_i32_0 : i32, i32, i32
  }
  func.func @transform_3(%arg0: i32, %arg1: i32) -> (i32, i32) {
    %c0_i32 = arith.constant 0 : i32
    %c0_i32_0 = arith.constant 0 : i32
    %c0_i32_1 = arith.constant 0 : i32
    return %c0_i32, %c0_i32_0 : i32, i32
  }
  func.func @transform_4(%arg0: i32, %arg1: i32) -> (i32, i32, i32) {
    %c0_i32 = arith.constant 0 : i32
    %c0_i32_0 = arith.constant 0 : i32
    %c0_i32_1 = arith.constant 0 : i32
    return %arg1, %c0_i32, %c0_i32_0 : i32, i32, i32
  }
  func.func @transform_5(%arg0: i32, %arg1: i32) -> (i32, i32, i32) {
    %c0_i32 = arith.constant 0 : i32
    %c0_i32_0 = arith.constant 0 : i32
    %c0_i32_1 = arith.constant 0 : i32
    return %arg1, %c0_i32, %c0_i32_0 : i32, i32, i32
  }
  func.func @transform_6(%arg0: i32, %arg1: i32) -> (i32, i32, i32) {
    %c0_i32 = arith.constant 0 : i32
    %c0_i32_0 = arith.constant 0 : i32
    %c0_i32_1 = arith.constant 0 : i32
    return %arg1, %c0_i32, %c0_i32_0 : i32, i32, i32
  }
  func.func @transform_7(%arg0: i32, %arg1: i32) -> (i32, i32, i32) {
    %c0_i32 = arith.constant 0 : i32
    %c0_i32_0 = arith.constant 0 : i32
    %c0_i32_1 = arith.constant 0 : i32
    return %arg1, %c0_i32, %c0_i32_0 : i32, i32, i32
  }
  func.func @transform_8(%arg0: i32, %arg1: i32) -> (i32, i32, i32) {
    %c0_i32 = arith.constant 0 : i32
    %c0_i32_0 = arith.constant 0 : i32
    %c0_i32_1 = arith.constant 0 : i32
    return %arg1, %c0_i32, %c0_i32_0 : i32, i32, i32
  }
  func.func @transform_9(%arg0: i32, %arg1: i32) -> (i32, i32, i32) {
    %c0_i32 = arith.constant 0 : i32
    %c0_i32_0 = arith.constant 0 : i32
    %c0_i32_1 = arith.constant 0 : i32
    return %arg1, %c0_i32, %c0_i32_0 : i32, i32, i32
  }
  func.func @transform_10(%arg0: i32, %arg1: i32) -> (i32, i32, i32) {
    %c0_i32 = arith.constant 0 : i32
    %c0_i32_0 = arith.constant 0 : i32
    %c0_i32_1 = arith.constant 0 : i32
    return %arg1, %c0_i32, %c0_i32_0 : i32, i32, i32
  }
  func.func @transform_11(%arg0: i32, %arg1: i32) -> (i32, i32, i32) {
    %c0_i32 = arith.constant 0 : i32
    %c0_i32_0 = arith.constant 0 : i32
    %c0_i32_1 = arith.constant 0 : i32
    return %arg1, %c0_i32, %c0_i32_0 : i32, i32, i32
  }
  func.func @transform_12(%arg0: i32, %arg1: i32) -> (i32, i32, i32) {
    %c0_i32 = arith.constant 0 : i32
    %c0_i32_0 = arith.constant 0 : i32
    %c0_i32_1 = arith.constant 0 : i32
    return %arg1, %c0_i32, %c0_i32_0 : i32, i32, i32
  }
  func.func @transform_13(%arg0: i32, %arg1: i32) -> (i32, i32, i32) {
    %c0_i32 = arith.constant 0 : i32
    %c0_i32_0 = arith.constant 0 : i32
    %c0_i32_1 = arith.constant 0 : i32
    return %arg1, %c0_i32, %c0_i32_0 : i32, i32, i32
  }
  func.func @transform_14(%arg0: i32, %arg1: i32) -> (i32, i32, i32) {
    %c0_i32 = arith.constant 0 : i32
    %c0_i32_0 = arith.constant 0 : i32
    %c0_i32_1 = arith.constant 0 : i32
    return %arg1, %c0_i32, %c0_i32_0 : i32, i32, i32
  }
  func.func @transform_15(%arg0: i32, %arg1: i32) -> (i32, i32, i32) {
    %c0_i32 = arith.constant 0 : i32
    %c0_i32_0 = arith.constant 0 : i32
    %c0_i32_1 = arith.constant 0 : i32
    return %arg1, %c0_i32, %c0_i32_0 : i32, i32, i32
  }
  func.func @transform_16(%arg0: i32, %arg1: i32) -> (i32, i32) {
    %c0_i32 = arith.constant 0 : i32
    %c0_i32_0 = arith.constant 0 : i32
    %c0_i32_1 = arith.constant 0 : i32
    return %c0_i32, %c0_i32_0 : i32, i32
  }
  func.func @transform_17(%arg0: i32, %arg1: i32) -> (i32, i32, i32) {
    %c0_i32 = arith.constant 0 : i32
    %c0_i32_0 = arith.constant 0 : i32
    %c0_i32_1 = arith.constant 0 : i32
    return %arg0, %c0_i32, %c0_i32_0 : i32, i32, i32
  }
}

</mosaic_0001>

<llo_original>
// kernel: tpu_custom_call.1
$region0: #{tpu_custom_call.1}
  #allocation0 [shape = 'u32[]', space=smem, size = 0x4, offset = 0x4, fixed_abs, tag = 'smem constant byte address 0x4 - core index']
  #allocation1 [shape = 'u32[144,128]{1,0:T(1,128)}', space=vmem, size = 0x12000, scoped, tag = 'internal scratch']
  #allocation2 [shape = 'f32[8,32]{1,0:T(8,128)}', space=vmem, size = 0x1000, scoped, tag = 'scratch operand']
  %s0 = inlined_call_operand.vmem [shape: f32[2,8,16], index: 0, kind: input, shape index: {}]
  %s1 = inlined_call_operand.vmem [shape: f32[8,32], index: 1, kind: input, shape index: {}]
  %s2 = inlined_call_operand.vmem [shape: f32[2,1,8], index: 2, kind: input, shape index: {}]
  %s3 = inlined_call_operand.vmem [shape: bf16[16,32], index: 3, kind: input, shape index: {}]
  %s4 = inlined_call_operand.vmem [shape: bf16[2,32,96], index: 4, kind: input, shape index: {}]
  %s5 = inlined_call_operand.vmem [shape: f32[2,1,96], index: 5, kind: input, shape index: {}]
  %s6 = inlined_call_operand.vmem [shape: bf16[2,32,32], index: 6, kind: input, shape index: {}]
  %s7 = inlined_call_operand.vmem [shape: f32[2,1,32], index: 7, kind: input, shape index: {}]
  %s8 = inlined_call_operand.vmem [shape: f32[2,1,32], index: 8, kind: input, shape index: {}]
  %s9 = inlined_call_operand.vmem [shape: f32[2,1,32], index: 9, kind: input, shape index: {}]
  %s10 = inlined_call_operand.vmem [shape: bf16[2,32,128], index: 10, kind: input, shape index: {}]
  %s11 = inlined_call_operand.vmem [shape: f32[2,1,128], index: 11, kind: input, shape index: {}]
  %s12 = inlined_call_operand.vmem [shape: bf16[2,128,32], index: 12, kind: input, shape index: {}]
  %s13 = inlined_call_operand.vmem [shape: f32[2,1,32], index: 13, kind: input, shape index: {}]
  %s14 = inlined_call_operand.vmem [shape: f32[2,1,32], index: 14, kind: input, shape index: {}]
  %s15 = inlined_call_operand.vmem [shape: f32[2,1,32], index: 15, kind: input, shape index: {}]
  %s16 = inlined_call_operand.vmem [shape: bf16[32,128], index: 16, kind: input, shape index: {}]
  %s17 = inlined_call_operand.hbm [shape: f32[2,1,128], index: 17, kind: output, shape index: {}]
  %s18 = sld [smem:[#allocation0]]
  $region109: #{tpu_custom_call.1} parent=0
    _
  %s20 = ssub.s32 1, %s18
  %s21 = scalar_select 0, %s20, %s18
  $region1: #{tpu_custom_call.1} parent=0
    #allocation3 [shape = 'u8[1024]{0}', space=vmem, size = 0x400, scoped, tag = 'output window, operand 0']
    #allocation4 [shape = 's32[2]{0}', space=sflag, size = 0x8, scoped, tag = 'scoped memory for tpu_custom_call.1']
    %22 = vsyncpa [#allocation4], 0
    %s23 = scalar_lea.sflag [#allocation4], 1
    %24 = vsyncpa %s23, 0
    loop: start=0, step=1, limit=6
    $region2: #{tpu_custom_call.1} parent=1 // loop_pre_header
      _
    $region3: #{tpu_custom_call.1} parent=1 // loop_header
      %s26 = sphi 0, %s30
      %p27 = scmp.ge.s32.totalorder %s26, 6
      %s33 = sphi 0, %s45
      %s34 = sphi 0, %s41
      %s35 = sphi 0, %s33
      %s36 = sphi 0, %s34
      %s37 = sphi 0, %s35
      %s38 = sphi 0, %s36
      %s48 = sphi 0, %s50
      %s51 = sphi 0, %s48
      %s52 = sphi 0, %s51
      %s68 = sphi 0, %s52
      %s72 = sphi 0, %s72
      %s74 = sphi 0, %s72
      %s75 = sphi 0, %s74
      %s89 = sphi 0, %s75
      %s95 = sphi 0, %s97
      %s98 = sphi 0, %s95
      %s99 = sphi 0, %s98
      %s115 = sphi 0, %s99
      %s119 = sphi 0, %s119
      %s121 = sphi 0, %s119
      %s122 = sphi 0, %s121
      %s136 = sphi 0, %s122
      %s142 = sphi 0, %s144
      %s145 = sphi 0, %s142
      %s146 = sphi 0, %s145
      %s162 = sphi 0, %s146
      %s168 = sphi 0, %s170
      %s171 = sphi 0, %s168
      %s172 = sphi 0, %s171
      %s188 = sphi 0, %s172
      %s194 = sphi 0, %s196
      %s197 = sphi 0, %s194
      %s198 = sphi 0, %s197
      %s214 = sphi 0, %s198
      %s220 = sphi 0, %s222
      %s223 = sphi 0, %s220
      %s224 = sphi 0, %s223
      %s240 = sphi 0, %s224
      %s246 = sphi 0, %s248
      %s249 = sphi 0, %s246
      %s250 = sphi 0, %s249
      %s266 = sphi 0, %s250
      %s272 = sphi 0, %s274
      %s275 = sphi 0, %s272
      %s276 = sphi 0, %s275
      %s292 = sphi 0, %s276
      %s298 = sphi 0, %s300
      %s301 = sphi 0, %s298
      %s302 = sphi 0, %s301
      %s318 = sphi 0, %s302
      %s324 = sphi 0, %s326
      %s327 = sphi 0, %s324
      %s328 = sphi 0, %s327
      %s344 = sphi 0, %s328
      %s350 = sphi 0, %s352
      %s353 = sphi 0, %s350
      %s354 = sphi 0, %s353
      %s370 = sphi 0, %s354
      %s376 = sphi 0, %s378
      %s379 = sphi 0, %s376
      %s380 = sphi 0, %s379
      %s396 = sphi 0, %s380
      %s402 = sphi 0, %s404
      %s405 = sphi 0, %s402
      %s406 = sphi 0, %s405
      %s422 = sphi 0, %s406
      %s428 = sphi 0, %s430
      %s431 = sphi 0, %s428
      %s432 = sphi 0, %s431
      %s448 = sphi 0, %s432
      %s452 = sphi 0, %s452
      %s454 = sphi 0, %s452
      %s455 = sphi 0, %s454
      %s469 = sphi 0, %s455
      %s475 = sphi 0, %s477
      %s478 = sphi 0, %s475
      %s479 = sphi 0, %s478
      %s495 = sphi 0, %s479
    $region4: #{tpu_custom_call.1} parent=1 // loop_header_branch
      %29 = sbr.rel (%p27) target = $region8
    $region5: #{tpu_custom_call.1} parent=1 // loop_body
      %s31 = ssub.s32 %s26, 1
      %s32 = ssub.s32 %s26, 2
      %s39 = sadd.s32 1, %s34
      %p40 = scmp.ge.s32.totalorder %s39, 2
      %s41 = scalar_select %p40, 0, %s39
      %s42 = sadd.s32 1, %s33
      %s43 = scalar_select %p40, %s42, %s33
      %p44 = scmp.ge.s32.totalorder %s43, 2
      %s45 = scalar_select %p44, 0, %s43
      %s46 = ssub.s32 %s33, %s45
      %p47 = scmp.eq.s32.totalorder %s46, 0
      %s49 = sadd.s32 %s48, 1
      %s50 = scalar_select %p47, %s48, %s49
      %p53 = pneg %p47
      %p54 = scmp.eq.s32.totalorder %s26, 3
      %p55 = por %p53, %p54
      %p56 = scmp.ne.s32.totalorder %s48, %s51
      %p57 = scmp.eq.s32.totalorder %s26, 0
      %p58 = por %p56, %p57
      %p59 = scmp.ne.s32.totalorder %s48, %s51
      %p60 = scmp.eq.s32.totalorder %s31, 3
      %p61 = por %p59, %p60
      %p62 = scmp.ne.s32.totalorder %s51, %s52
      %p63 = scmp.eq.s32.totalorder %s31, 0
      %p64 = por %p62, %p63
      %p65 = scmp.ne.s32.totalorder %s51, %s52
      %p66 = scmp.eq.s32.totalorder %s32, 3
      %p67 = por %p65, %p66
      %p69 = scmp.ne.s32.totalorder %s52, %s68
      %p70 = scmp.eq.s32.totalorder %s32, 0
      %p71 = por %p69, %p70
      %s73 = sadd.s32 %s72, 1
      %p76 = scmp.eq.s32.totalorder %s26, 3
      %p77 = scmp.ne.s32.totalorder %s72, %s74
      %p78 = scmp.eq.s32.totalorder %s26, 0
      %p79 = por %p77, %p78
      %p80 = scmp.ne.s32.totalorder %s72, %s74
      %p81 = scmp.eq.s32.totalorder %s31, 3
      %p82 = por %p80, %p81
      %p83 = scmp.ne.s32.totalorder %s74, %s75
      %p84 = scmp.eq.s32.totalorder %s31, 0
      %p85 = por %p83, %p84
      %p86 = scmp.ne.s32.totalorder %s74, %s75
      %p87 = scmp.eq.s32.totalorder %s32, 3
      %p88 = por %p86, %p87
      %p90 = scmp.ne.s32.totalorder %s75, %s89
      %p91 = scmp.eq.s32.totalorder %s32, 0
      %p92 = por %p90, %p91
      %s93 = ssub.s32 %s33, %s45
      %p94 = scmp.eq.s32.totalorder %s93, 0
      %s96 = sadd.s32 %s95, 1
      %s97 = scalar_select %p94, %s95, %s96
      %p100 = pneg %p94
      %p101 = scmp.eq.s32.totalorder %s26, 3
      %p102 = por %p100, %p101
      %p103 = scmp.ne.s32.totalorder %s95, %s98
      %p104 = scmp.eq.s32.totalorder %s26, 0
      %p105 = por %p103, %p104
      %p106 = scmp.ne.s32.totalorder %s95, %s98
      %p107 = scmp.eq.s32.totalorder %s31, 3
      %p108 = por %p106, %p107
      %p109 = scmp.ne.s32.totalorder %s98, %s99
      %p110 = scmp.eq.s32.totalorder %s31, 0
      %p111 = por %p109, %p110
      %p112 = scmp.ne.s32.totalorder %s98, %s99
      %p113 = scmp.eq.s32.totalorder %s32, 3
      %p114 = por %p112, %p113
      %p116 = scmp.ne.s32.totalorder %s99, %s115
      %p117 = scmp.eq.s32.totalorder %s32, 0
      %p118 = por %p116, %p117
      %s120 = sadd.s32 %s119, 1
      %p123 = scmp.eq.s32.totalorder %s26, 3
      %p124 = scmp.ne.s32.totalorder %s119, %s121
      %p125 = scmp.eq.s32.totalorder %s26, 0
      %p126 = por %p124, %p125
      %p127 = scmp.ne.s32.totalorder %s119, %s121
      %p128 = scmp.eq.s32.totalorder %s31, 3
      %p129 = por %p127, %p128
      %p130 = scmp.ne.s32.totalorder %s121, %s122
      %p131 = scmp.eq.s32.totalorder %s31, 0
      %p132 = por %p130, %p131
      %p133 = scmp.ne.s32.totalorder %s121, %s122
      %p134 = scmp.eq.s32.totalorder %s32, 3
      %p135 = por %p133, %p134
      %p137 = scmp.ne.s32.totalorder %s122, %s136
      %p138 = scmp.eq.s32.totalorder %s32, 0
      %p139 = por %p137, %p138
      %s140 = ssub.s32 %s34, %s41
      %p141 = scmp.eq.s32.totalorder %s140, 0
      %s143 = sadd.s32 %s142, 1
      %s144 = scalar_select %p141, %s142, %s143
      %p147 = pneg %p141
      %p148 = scmp.eq.s32.totalorder %s26, 3
      %p149 = por %p147, %p148
      %p150 = scmp.ne.s32.totalorder %s142, %s145
      %p151 = scmp.eq.s32.totalorder %s26, 0
      %p152 = por %p150, %p151
      %p153 = scmp.ne.s32.totalorder %s142, %s145
      %p154 = scmp.eq.s32.totalorder %s31, 3
      %p155 = por %p153, %p154
      %p156 = scmp.ne.s32.totalorder %s145, %s146
      %p157 = scmp.eq.s32.totalorder %s31, 0
      %p158 = por %p156, %p157
      %p159 = scmp.ne.s32.totalorder %s145, %s146
      %p160 = scmp.eq.s32.totalorder %s32, 3
      %p161 = por %p159, %p160
      %p163 = scmp.ne.s32.totalorder %s146, %s162
      %p164 = scmp.eq.s32.totalorder %s32, 0
      %p165 = por %p163, %p164
      %s166 = ssub.s32 %s34, %s41
      %p167 = scmp.eq.s32.totalorder %s166, 0
      %s169 = sadd.s32 %s168, 1
      %s170 = scalar_select %p167, %s168, %s169
      %p173 = pneg %p167
      %p174 = scmp.eq.s32.totalorder %s26, 3
      %p175 = por %p173, %p174
      %p176 = scmp.ne.s32.totalorder %s168, %s171
      %p177 = scmp.eq.s32.totalorder %s26, 0
      %p178 = por %p176, %p177
      %p179 = scmp.ne.s32.totalorder %s168, %s171
      %p180 = scmp.eq.s32.totalorder %s31, 3
      %p181 = por %p179, %p180
      %p182 = scmp.ne.s32.totalorder %s171, %s172
      %p183 = scmp.eq.s32.totalorder %s31, 0
      %p184 = por %p182, %p183
      %p185 = scmp.ne.s32.totalorder %s171, %s172
      %p186 = scmp.eq.s32.totalorder %s32, 3
      %p187 = por %p185, %p186
      %p189 = scmp.ne.s32.totalorder %s172, %s188
      %p190 = scmp.eq.s32.totalorder %s32, 0
      %p191 = por %p189, %p190
      %s192 = ssub.s32 %s34, %s41
      %p193 = scmp.eq.s32.totalorder %s192, 0
      %s195 = sadd.s32 %s194, 1
      %s196 = scalar_select %p193, %s194, %s195
      %p199 = pneg %p193
      %p200 = scmp.eq.s32.totalorder %s26, 3
      %p201 = por %p199, %p200
      %p202 = scmp.ne.s32.totalorder %s194, %s197
      %p203 = scmp.eq.s32.totalorder %s26, 0
      %p204 = por %p202, %p203
      %p205 = scmp.ne.s32.totalorder %s194, %s197
      %p206 = scmp.eq.s32.totalorder %s31, 3
      %p207 = por %p205, %p206
      %p208 = scmp.ne.s32.totalorder %s197, %s198
      %p209 = scmp.eq.s32.totalorder %s31, 0
      %p210 = por %p208, %p209
      %p211 = scmp.ne.s32.totalorder %s197, %s198
      %p212 = scmp.eq.s32.totalorder %s32, 3
      %p213 = por %p211, %p212
      %p215 = scmp.ne.s32.totalorder %s198, %s214
      %p216 = scmp.eq.s32.totalorder %s32, 0
      %p217 = por %p215, %p216
      %s218 = ssub.s32 %s34, %s41
      %p219 = scmp.eq.s32.totalorder %s218, 0
      %s221 = sadd.s32 %s220, 1
      %s222 = scalar_select %p219, %s220, %s221
      %p225 = pneg %p219
      %p226 = scmp.eq.s32.totalorder %s26, 3
      %p227 = por %p225, %p226
      %p228 = scmp.ne.s32.totalorder %s220, %s223
      %p229 = scmp.eq.s32.totalorder %s26, 0
      %p230 = por %p228, %p229
      %p231 = scmp.ne.s32.totalorder %s220, %s223
      %p232 = scmp.eq.s32.totalorder %s31, 3
      %p233 = por %p231, %p232
      %p234 = scmp.ne.s32.totalorder %s223, %s224
      %p235 = scmp.eq.s32.totalorder %s31, 0
      %p236 = por %p234, %p235
      %p237 = scmp.ne.s32.totalorder %s223, %s224
      %p238 = scmp.eq.s32.totalorder %s32, 3
      %p239 = por %p237, %p238
      %p241 = scmp.ne.s32.totalorder %s224, %s240
      %p242 = scmp.eq.s32.totalorder %s32, 0
      %p243 = por %p241, %p242
      %s244 = ssub.s32 %s34, %s41
      %p245 = scmp.eq.s32.totalorder %s244, 0
      %s247 = sadd.s32 %s246, 1
      %s248 = scalar_select %p245, %s246, %s247
      %p251 = pneg %p245
      %p252 = scmp.eq.s32.totalorder %s26, 3
      %p253 = por %p251, %p252
      %p254 = scmp.ne.s32.totalorder %s246, %s249
      %p255 = scmp.eq.s32.totalorder %s26, 0
      %p256 = por %p254, %p255
      %p257 = scmp.ne.s32.totalorder %s246, %s249
      %p258 = scmp.eq.s32.totalorder %s31, 3
      %p259 = por %p257, %p258
      %p260 = scmp.ne.s32.totalorder %s249, %s250
      %p261 = scmp.eq.s32.totalorder %s31, 0
      %p262 = por %p260, %p261
      %p263 = scmp.ne.s32.totalorder %s249, %s250
      %p264 = scmp.eq.s32.totalorder %s32, 3
      %p265 = por %p263, %p264
      %p267 = scmp.ne.s32.totalorder %s250, %s266
      %p268 = scmp.eq.s32.totalorder %s32, 0
      %p269 = por %p267, %p268
      %s270 = ssub.s32 %s34, %s41
      %p271 = scmp.eq.s32.totalorder %s270, 0
      %s273 = sadd.s32 %s272, 1
      %s274 = scalar_select %p271, %s272, %s273
      %p277 = pneg %p271
      %p278 = scmp.eq.s32.totalorder %s26, 3
      %p279 = por %p277, %p278
      %p280 = scmp.ne.s32.totalorder %s272, %s275
      %p281 = scmp.eq.s32.totalorder %s26, 0
      %p282 = por %p280, %p281
      %p283 = scmp.ne.s32.totalorder %s272, %s275
      %p284 = scmp.eq.s32.totalorder %s31, 3
      %p285 = por %p283, %p284
      %p286 = scmp.ne.s32.totalorder %s275, %s276
      %p287 = scmp.eq.s32.totalorder %s31, 0
      %p288 = por %p286, %p287
      %p289 = scmp.ne.s32.totalorder %s275, %s276
      %p290 = scmp.eq.s32.totalorder %s32, 3
      %p291 = por %p289, %p290
      %p293 = scmp.ne.s32.totalorder %s276, %s292
      %p294 = scmp.eq.s32.totalorder %s32, 0
      %p295 = por %p293, %p294
      %s296 = ssub.s32 %s34, %s41
      %p297 = scmp.eq.s32.totalorder %s296, 0
      %s299 = sadd.s32 %s298, 1
      %s300 = scalar_select %p297, %s298, %s299
      %p303 = pneg %p297
      %p304 = scmp.eq.s32.totalorder %s26, 3
      %p305 = por %p303, %p304
      %p306 = scmp.ne.s32.totalorder %s298, %s301
      %p307 = scmp.eq.s32.totalorder %s26, 0
      %p308 = por %p306, %p307
      %p309 = scmp.ne.s32.totalorder %s298, %s301
      %p310 = scmp.eq.s32.totalorder %s31, 3
      %p311 = por %p309, %p310
      %p312 = scmp.ne.s32.totalorder %s301, %s302
      %p313 = scmp.eq.s32.totalorder %s31, 0
      %p314 = por %p312, %p313
      %p315 = scmp.ne.s32.totalorder %s301, %s302
      %p316 = scmp.eq.s32.totalorder %s32, 3
      %p317 = por %p315, %p316
      %p319 = scmp.ne.s32.totalorder %s302, %s318
      %p320 = scmp.eq.s32.totalorder %s32, 0
      %p321 = por %p319, %p320
      %s322 = ssub.s32 %s34, %s41
      %p323 = scmp.eq.s32.totalorder %s322, 0
      %s325 = sadd.s32 %s324, 1
      %s326 = scalar_select %p323, %s324, %s325
      %p329 = pneg %p323
      %p330 = scmp.eq.s32.totalorder %s26, 3
      %p331 = por %p329, %p330
      %p332 = scmp.ne.s32.totalorder %s324, %s327
      %p333 = scmp.eq.s32.totalorder %s26, 0
      %p334 = por %p332, %p333
      %p335 = scmp.ne.s32.totalorder %s324, %s327
      %p336 = scmp.eq.s32.totalorder %s31, 3
      %p337 = por %p335, %p336
      %p338 = scmp.ne.s32.totalorder %s327, %s328
      %p339 = scmp.eq.s32.totalorder %s31, 0
      %p340 = por %p338, %p339
      %p341 = scmp.ne.s32.totalorder %s327, %s328
      %p342 = scmp.eq.s32.totalorder %s32, 3
      %p343 = por %p341, %p342
      %p345 = scmp.ne.s32.totalorder %s328, %s344
      %p346 = scmp.eq.s32.totalorder %s32, 0
      %p347 = por %p345, %p346
      %s348 = ssub.s32 %s34, %s41
      %p349 = scmp.eq.s32.totalorder %s348, 0
      %s351 = sadd.s32 %s350, 1
      %s352 = scalar_select %p349, %s350, %s351
      %p355 = pneg %p349
      %p356 = scmp.eq.s32.totalorder %s26, 3
      %p357 = por %p355, %p356
      %p358 = scmp.ne.s32.totalorder %s350, %s353
      %p359 = scmp.eq.s32.totalorder %s26, 0
      %p360 = por %p358, %p359
      %p361 = scmp.ne.s32.totalorder %s350, %s353
      %p362 = scmp.eq.s32.totalorder %s31, 3
      %p363 = por %p361, %p362
      %p364 = scmp.ne.s32.totalorder %s353, %s354
      %p365 = scmp.eq.s32.totalorder %s31, 0
      %p366 = por %p364, %p365
      %p367 = scmp.ne.s32.totalorder %s353, %s354
      %p368 = scmp.eq.s32.totalorder %s32, 3
      %p369 = por %p367, %p368
      %p371 = scmp.ne.s32.totalorder %s354, %s370
      %p372 = scmp.eq.s32.totalorder %s32, 0
      %p373 = por %p371, %p372
      %s374 = ssub.s32 %s34, %s41
      %p375 = scmp.eq.s32.totalorder %s374, 0
      %s377 = sadd.s32 %s376, 1
      %s378 = scalar_select %p375, %s376, %s377
      %p381 = pneg %p375
      %p382 = scmp.eq.s32.totalorder %s26, 3
      %p383 = por %p381, %p382
      %p384 = scmp.ne.s32.totalorder %s376, %s379
      %p385 = scmp.eq.s32.totalorder %s26, 0
      %p386 = por %p384, %p385
      %p387 = scmp.ne.s32.totalorder %s376, %s379
      %p388 = scmp.eq.s32.totalorder %s31, 3
      %p389 = por %p387, %p388
      %p390 = scmp.ne.s32.totalorder %s379, %s380
      %p391 = scmp.eq.s32.totalorder %s31, 0
      %p392 = por %p390, %p391
      %p393 = scmp.ne.s32.totalorder %s379, %s380
      %p394 = scmp.eq.s32.totalorder %s32, 3
      %p395 = por %p393, %p394
      %p397 = scmp.ne.s32.totalorder %s380, %s396
      %p398 = scmp.eq.s32.totalorder %s32, 0
      %p399 = por %p397, %p398
      %s400 = ssub.s32 %s34, %s41
      %p401 = scmp.eq.s32.totalorder %s400, 0
      %s403 = sadd.s32 %s402, 1
      %s404 = scalar_select %p401, %s402, %s403
      %p407 = pneg %p401
      %p408 = scmp.eq.s32.totalorder %s26, 3
      %p409 = por %p407, %p408
      %p410 = scmp.ne.s32.totalorder %s402, %s405
      %p411 = scmp.eq.s32.totalorder %s26, 0
      %p412 = por %p410, %p411
      %p413 = scmp.ne.s32.totalorder %s402, %s405
      %p414 = scmp.eq.s32.totalorder %s31, 3
      %p415 = por %p413, %p414
      %p416 = scmp.ne.s32.totalorder %s405, %s406
      %p417 = scmp.eq.s32.totalorder %s31, 0
      %p418 = por %p416, %p417
      %p419 = scmp.ne.s32.totalorder %s405, %s406
      %p420 = scmp.eq.s32.totalorder %s32, 3
      %p421 = por %p419, %p420
      %p423 = scmp.ne.s32.totalorder %s406, %s422
      %p424 = scmp.eq.s32.totalorder %s32, 0
      %p425 = por %p423, %p424
      %s426 = ssub.s32 %s34, %s41
      %p427 = scmp.eq.s32.totalorder %s426, 0
      %s429 = sadd.s32 %s428, 1
      %s430 = scalar_select %p427, %s428, %s429
      %p433 = pneg %p427
      %p434 = scmp.eq.s32.totalorder %s26, 3
      %p435 = por %p433, %p434
      %p436 = scmp.ne.s32.totalorder %s428, %s431
      %p437 = scmp.eq.s32.totalorder %s26, 0
      %p438 = por %p436, %p437
      %p439 = scmp.ne.s32.totalorder %s428, %s431
      %p440 = scmp.eq.s32.totalorder %s31, 3
      %p441 = por %p439, %p440
      %p442 = scmp.ne.s32.totalorder %s431, %s432
      %p443 = scmp.eq.s32.totalorder %s31, 0
      %p444 = por %p442, %p443
      %p445 = scmp.ne.s32.totalorder %s431, %s432
      %p446 = scmp.eq.s32.totalorder %s32, 3
      %p447 = por %p445, %p446
      %p449 = scmp.ne.s32.totalorder %s432, %s448
      %p450 = scmp.eq.s32.totalorder %s32, 0
      %p451 = por %p449, %p450
      %s453 = sadd.s32 %s452, 1
      %p456 = scmp.eq.s32.totalorder %s26, 3
      %p457 = scmp.ne.s32.totalorder %s452, %s454
      %p458 = scmp.eq.s32.totalorder %s26, 0
      %p459 = por %p457, %p458
      %p460 = scmp.ne.s32.totalorder %s452, %s454
      %p461 = scmp.eq.s32.totalorder %s31, 3
      %p462 = por %p460, %p461
      %p463 = scmp.ne.s32.totalorder %s454, %s455
      %p464 = scmp.eq.s32.totalorder %s31, 0
      %p465 = por %p463, %p464
      %p466 = scmp.ne.s32.totalorder %s454, %s455
      %p467 = scmp.eq.s32.totalorder %s32, 3
      %p468 = por %p466, %p467
      %p470 = scmp.ne.s32.totalorder %s455, %s469
      %p471 = scmp.eq.s32.totalorder %s32, 0
      %p472 = por %p470, %p471
      %s473 = ssub.s32 %s33, %s45
      %p474 = scmp.eq.s32.totalorder %s473, 0
      %s476 = sadd.s32 %s475, 1
      %s477 = scalar_select %p474, %s475, %s476
      %p480 = pneg %p474
      %p481 = scmp.eq.s32.totalorder %s26, 3
      %p482 = por %p480, %p481
      %p483 = scmp.ne.s32.totalorder %s475, %s478
      %p484 = scmp.eq.s32.totalorder %s26, 0
      %p485 = por %p483, %p484
      %p486 = scmp.ne.s32.totalorder %s475, %s478
      %p487 = scmp.eq.s32.totalorder %s31, 3
      %p488 = por %p486, %p487
      %p489 = scmp.ne.s32.totalorder %s478, %s479
      %p490 = scmp.eq.s32.totalorder %s31, 0
      %p491 = por %p489, %p490
      %p492 = scmp.ne.s32.totalorder %s478, %s479
      %p493 = scmp.eq.s32.totalorder %s32, 3
      %p494 = por %p492, %p493
      %p496 = scmp.ne.s32.totalorder %s479, %s495
      %p497 = scmp.eq.s32.totalorder %s32, 0
      %p498 = por %p496, %p497
      %p499 = scmp.le.s32.totalorder 1, %s26
      %p500 = scmp.lt.s32.totalorder %s26, 5
      %p501 = pnand %p499, %p500
      %p502 = pneg %p501
      // Predicated region
      $region9: #{tpu_custom_call.1} parent=5 // pred_check
        _
      $region10: #{tpu_custom_call.1} parent=5 // pred_check_branch
        %504 = sbr.rel (%p501) target = $region12
      $region11: #{tpu_custom_call.1} parent=5 // pred_region
        %s505 = ssub.s32 %s26, 1
        // Predicated region
        $region13: #{tpu_custom_call.1} parent=11 // pred_check
          %p506 = pneg %p85
        $region14: #{tpu_custom_call.1} parent=11 // pred_check_branch
          %508 = sbr.rel (%p506) target = $region16
        $region15: #{tpu_custom_call.1} parent=11 // pred_region
          _
        $region16: #{tpu_custom_call.1} parent=11 // pred_fallthru
          _
        // Predicated region
        $region17: #{tpu_custom_call.1} parent=11 // pred_check
          %p509 = pneg %p132
        $region18: #{tpu_custom_call.1} parent=11 // pred_check_branch
          %511 = sbr.rel (%p509) target = $region20
        $region19: #{tpu_custom_call.1} parent=11 // pred_region
          _
        $region20: #{tpu_custom_call.1} parent=11 // pred_fallthru
          _
        // Predicated region
        $region21: #{tpu_custom_call.1} parent=11 // pred_check
          %p512 = pneg %p465
        $region22: #{tpu_custom_call.1} parent=11 // pred_check_branch
          %514 = sbr.rel (%p512) target = $region24
        $region23: #{tpu_custom_call.1} parent=11 // pred_region
          _
        $region24: #{tpu_custom_call.1} parent=11 // pred_fallthru
          _
      $region12: #{tpu_custom_call.1} parent=5 // pred_fallthru
        _
      %p515 = scmp.lt.s32.totalorder %s26, 4
      // Predicated region
      $region25: #{tpu_custom_call.1} parent=5 // pred_check
        %p516 = pneg %p515
      $region26: #{tpu_custom_call.1} parent=5 // pred_check_branch
        %518 = sbr.rel (%p516) target = $region28
      $region27: #{tpu_custom_call.1} parent=5 // pred_region
        // Predicated region
        $region29: #{tpu_custom_call.1} parent=27 // pred_check
          %p519 = pneg %p58
        $region30: #{tpu_custom_call.1} parent=27 // pred_check_branch
          %521 = sbr.rel (%p519) target = $region32
        $region31: #{tpu_custom_call.1} parent=27 // pred_region
          %p522 = scmp.lt.s32.totalorder %s33, 1
          %s523 = scalar_select %p522, %s33, 1
          %s524 = smul.addr %s523, 8
          %s525 = scalar_lea.vmem %s0, %s524
        $region32: #{tpu_custom_call.1} parent=27 // pred_fallthru
          _
        // Predicated region
        $region33: #{tpu_custom_call.1} parent=27 // pred_check
          %p526 = pneg %p105
        $region34: #{tpu_custom_call.1} parent=27 // pred_check_branch
          %528 = sbr.rel (%p526) target = $region36
        $region35: #{tpu_custom_call.1} parent=27 // pred_region
          %p529 = scmp.lt.s32.totalorder %s33, 1
          %s530 = scalar_select %p529, %s33, 1
          %s531 = scalar_lea.vmem %s2, %s530
        $region36: #{tpu_custom_call.1} parent=27 // pred_fallthru
          _
        // Predicated region
        $region37: #{tpu_custom_call.1} parent=27 // pred_check
          %p532 = pneg %p152
        $region38: #{tpu_custom_call.1} parent=27 // pred_check_branch
          %534 = sbr.rel (%p532) target = $region40
        $region39: #{tpu_custom_call.1} parent=27 // pred_region
          %p535 = scmp.lt.s32.totalorder %s34, 1
          %s536 = scalar_select %p535, %s34, 1
          %s537 = smul.addr %s536, 4
          %s538 = smul.addr %s537, 4
          %s539 = scalar_lea.vmem %s4, %s538
        $region40: #{tpu_custom_call.1} parent=27 // pred_fallthru
          _
        // Predicated region
        $region41: #{tpu_custom_call.1} parent=27 // pred_check
          %p540 = pneg %p178
        $region42: #{tpu_custom_call.1} parent=27 // pred_check_branch
          %542 = sbr.rel (%p540) target = $region44
        $region43: #{tpu_custom_call.1} parent=27 // pred_region
          %p543 = scmp.lt.s32.totalorder %s34, 1
          %s544 = scalar_select %p543, %s34, 1
          %s545 = scalar_lea.vmem %s5, %s544
        $region44: #{tpu_custom_call.1} parent=27 // pred_fallthru
          _
        // Predicated region
        $region45: #{tpu_custom_call.1} parent=27 // pred_check
          %p546 = pneg %p204
        $region46: #{tpu_custom_call.1} parent=27 // pred_check_branch
          %548 = sbr.rel (%p546) target = $region48
        $region47: #{tpu_custom_call.1} parent=27 // pred_region
          %p549 = scmp.lt.s32.totalorder %s34, 1
          %s550 = scalar_select %p549, %s34, 1
          %s551 = smul.addr %s550, 4
          %s552 = smul.addr %s551, 4
          %s553 = scalar_lea.vmem %s6, %s552
        $region48: #{tpu_custom_call.1} parent=27 // pred_fallthru
          _
        // Predicated region
        $region49: #{tpu_custom_call.1} parent=27 // pred_check
          %p554 = pneg %p230
        $region50: #{tpu_custom_call.1} parent=27 // pred_check_branch
          %556 = sbr.rel (%p554) target = $region52
        $region51: #{tpu_custom_call.1} parent=27 // pred_region
          %p557 = scmp.lt.s32.totalorder %s34, 1
          %s558 = scalar_select %p557, %s34, 1
          %s559 = scalar_lea.vmem %s7, %s558
        $region52: #{tpu_custom_call.1} parent=27 // pred_fallthru
          _
        // Predicated region
        $region53: #{tpu_custom_call.1} parent=27 // pred_check
          %p560 = pneg %p256
        $region54: #{tpu_custom_call.1} parent=27 // pred_check_branch
          %562 = sbr.rel (%p560) target = $region56
        $region55: #{tpu_custom_call.1} parent=27 // pred_region
          %p563 = scmp.lt.s32.totalorder %s34, 1
          %s564 = scalar_select %p563, %s34, 1
          %s565 = scalar_lea.vmem %s8, %s564
        $region56: #{tpu_custom_call.1} parent=27 // pred_fallthru
          _
        // Predicated region
        $region57: #{tpu_custom_call.1} parent=27 // pred_check
          %p566 = pneg %p282
        $region58: #{tpu_custom_call.1} parent=27 // pred_check_branch
          %568 = sbr.rel (%p566) target = $region60
        $region59: #{tpu_custom_call.1} parent=27 // pred_region
          %p569 = scmp.lt.s32.totalorder %s34, 1
          %s570 = scalar_select %p569, %s34, 1
          %s571 = scalar_lea.vmem %s9, %s570
        $region60: #{tpu_custom_call.1} parent=27 // pred_fallthru
          _
        // Predicated region
        $region61: #{tpu_custom_call.1} parent=27 // pred_check
          %p572 = pneg %p308
        $region62: #{tpu_custom_call.1} parent=27 // pred_check_branch
          %574 = sbr.rel (%p572) target = $region64
        $region63: #{tpu_custom_call.1} parent=27 // pred_region
          %p575 = scmp.lt.s32.totalorder %s34, 1
          %s576 = scalar_select %p575, %s34, 1
          %s577 = smul.addr %s576, 4
          %s578 = smul.addr %s577, 4
          %s579 = scalar_lea.vmem %s10, %s578
        $region64: #{tpu_custom_call.1} parent=27 // pred_fallthru
          _
        // Predicated region
        $region65: #{tpu_custom_call.1} parent=27 // pred_check
          %p580 = pneg %p334
        $region66: #{tpu_custom_call.1} parent=27 // pred_check_branch
          %582 = sbr.rel (%p580) target = $region68
        $region67: #{tpu_custom_call.1} parent=27 // pred_region
          %p583 = scmp.lt.s32.totalorder %s34, 1
          %s584 = scalar_select %p583, %s34, 1
          %s585 = scalar_lea.vmem %s11, %s584
        $region68: #{tpu_custom_call.1} parent=27 // pred_fallthru
          _
        // Predicated region
        $region69: #{tpu_custom_call.1} parent=27 // pred_check
          %p586 = pneg %p360
        $region70: #{tpu_custom_call.1} parent=27 // pred_check_branch
          %588 = sbr.rel (%p586) target = $region72
        $region71: #{tpu_custom_call.1} parent=27 // pred_region
          %p589 = scmp.lt.s32.totalorder %s34, 1
          %s590 = scalar_select %p589, %s34, 1
          %s591 = smul.addr %s590, 16
          %s592 = smul.addr %s591, 4
          %s593 = scalar_lea.vmem %s12, %s592
        $region72: #{tpu_custom_call.1} parent=27 // pred_fallthru
          _
        // Predicated region
        $region73: #{tpu_custom_call.1} parent=27 // pred_check
          %p594 = pneg %p386
        $region74: #{tpu_custom_call.1} parent=27 // pred_check_branch
          %596 = sbr.rel (%p594) target = $region76
        $region75: #{tpu_custom_call.1} parent=27 // pred_region
          %p597 = scmp.lt.s32.totalorder %s34, 1
          %s598 = scalar_select %p597, %s34, 1
          %s599 = scalar_lea.vmem %s13, %s598
        $region76: #{tpu_custom_call.1} parent=27 // pred_fallthru
          _
        // Predicated region
        $region77: #{tpu_custom_call.1} parent=27 // pred_check
          %p600 = pneg %p412
        $region78: #{tpu_custom_call.1} parent=27 // pred_check_branch
          %602 = sbr.rel (%p600) target = $region80
        $region79: #{tpu_custom_call.1} parent=27 // pred_region
          %p603 = scmp.lt.s32.totalorder %s34, 1
          %s604 = scalar_select %p603, %s34, 1
          %s605 = scalar_lea.vmem %s14, %s604
        $region80: #{tpu_custom_call.1} parent=27 // pred_fallthru
          _
        // Predicated region
        $region81: #{tpu_custom_call.1} parent=27 // pred_check
          %p606 = pneg %p438
        $region82: #{tpu_custom_call.1} parent=27 // pred_check_branch
          %608 = sbr.rel (%p606) target = $region84
        $region83: #{tpu_custom_call.1} parent=27 // pred_region
          %p609 = scmp.lt.s32.totalorder %s34, 1
          %s610 = scalar_select %p609, %s34, 1
          %s611 = scalar_lea.vmem %s15, %s610
        $region84: #{tpu_custom_call.1} parent=27 // pred_fallthru
          _
      $region28: #{tpu_custom_call.1} parent=5 // pred_fallthru
        _
      %p612 = scmp.le.s32.totalorder 1, %s26
      %p613 = scmp.lt.s32.totalorder %s26, 5
      %p614 = pnand %p612, %p613
      %p615 = pneg %p614
      // Predicated region
      $region85: #{tpu_custom_call.1} parent=5 // pred_check
        _
      $region86: #{tpu_custom_call.1} parent=5 // pred_check_branch
        %617 = sbr.rel (%p614) target = $region88
      $region87: #{tpu_custom_call.1} parent=5 // pred_region
        %s618 = ssub.s32 %s26, 1
        %p619 = scmp.lt.s32.totalorder %s35, 1
        %s620 = scalar_select %p619, %s35, 1
        %s621 = smul.addr %s620, 8
        %s622 = scalar_lea.vmem %s0, %s621
        %p623 = pneg %p64
        %p624 = pneg %p61
        %p625 = pneg %p85
        %p626 = pneg %p82
        %p627 = scmp.lt.s32.totalorder %s35, 1
        %s628 = scalar_select %p627, %s35, 1
        %s629 = scalar_lea.vmem %s2, %s628
        %p630 = pneg %p111
        %p631 = pneg %p108
        %p632 = pneg %p132
        %p633 = pneg %p129
        %p634 = scmp.lt.s32.totalorder %s36, 1
        %s635 = scalar_select %p634, %s36, 1
        %s636 = smul.addr %s635, 4
        %s637 = smul.addr %s636, 4
        %s638 = scalar_lea.vmem %s4, %s637
        %p639 = pneg %p158
        %p640 = pneg %p155
        %p641 = scmp.lt.s32.totalorder %s36, 1
        %s642 = scalar_select %p641, %s36, 1
        %s643 = scalar_lea.vmem %s5, %s642
        %p644 = pneg %p184
        %p645 = pneg %p181
        %p646 = scmp.lt.s32.totalorder %s36, 1
        %s647 = scalar_select %p646, %s36, 1
        %s648 = smul.addr %s647, 4
        %s649 = smul.addr %s648, 4
        %s650 = scalar_lea.vmem %s6, %s649
        %p651 = pneg %p210
        %p652 = pneg %p207
        %p653 = scmp.lt.s32.totalorder %s36, 1
        %s654 = scalar_select %p653, %s36, 1
        %s655 = scalar_lea.vmem %s7, %s654
        %p656 = pneg %p236
        %p657 = pneg %p233
        %p658 = scmp.lt.s32.totalorder %s36, 1
        %s659 = scalar_select %p658, %s36, 1
        %s660 = scalar_lea.vmem %s8, %s659
        %p661 = pneg %p262
        %p662 = pneg %p259
        %p663 = scmp.lt.s32.totalorder %s36, 1
        %s664 = scalar_select %p663, %s36, 1
        %s665 = scalar_lea.vmem %s9, %s664
        %p666 = pneg %p288
        %p667 = pneg %p285
        %p668 = scmp.lt.s32.totalorder %s36, 1
        %s669 = scalar_select %p668, %s36, 1
        %s670 = smul.addr %s669, 4
        %s671 = smul.addr %s670, 4
        %s672 = scalar_lea.vmem %s10, %s671
        %p673 = pneg %p314
        %p674 = pneg %p311
        %p675 = scmp.lt.s32.totalorder %s36, 1
        %s676 = scalar_select %p675, %s36, 1
        %s677 = scalar_lea.vmem %s11, %s676
        %p678 = pneg %p340
        %p679 = pneg %p337
        %p680 = scmp.lt.s32.totalorder %s36, 1
        %s681 = scalar_select %p680, %s36, 1
        %s682 = smul.addr %s681, 16
        %s683 = smul.addr %s682, 4
        %s684 = scalar_lea.vmem %s12, %s683
        %p685 = pneg %p366
        %p686 = pneg %p363
        %p687 = scmp.lt.s32.totalorder %s36, 1
        %s688 = scalar_select %p687, %s36, 1
        %s689 = scalar_lea.vmem %s13, %s688
        %p690 = pneg %p392
        %p691 = pneg %p389
        %p692 = scmp.lt.s32.totalorder %s36, 1
        %s693 = scalar_select %p692, %s36, 1
        %s694 = scalar_lea.vmem %s14, %s693
        %p695 = pneg %p418
        %p696 = pneg %p415
        %p697 = scmp.lt.s32.totalorder %s36, 1
        %s698 = scalar_select %p697, %s36, 1
        %s699 = scalar_lea.vmem %s15, %s698
        %p700 = pneg %p444
        %p701 = pneg %p441
        %p702 = pneg %p465
        %p703 = pneg %p462
        %p704 = pneg %p491
        %p705 = pneg %p488
        %s706 = sand.u32 %s478, 1
        %s707 = scalar_lea.sflag [#allocation4], %s706
        %s708 = sand.u32 %s478, 1
        %s709 = scalar_lea.vmem [#allocation3], %s708
        %p710 = scmp.lt.s32.totalorder %s35, 1
        %s711 = scalar_select %p710, %s35, 1
        %s712 = smul.addr %s711, 8
        %s713 = scalar_lea.vmem %s0, %s712
        %p714 = scmp.lt.s32.totalorder %s35, 1
        %s715 = scalar_select %p714, %s35, 1
        %s716 = scalar_lea.vmem %s2, %s715
        %p717 = scmp.lt.s32.totalorder %s36, 1
        %s718 = scalar_select %p717, %s36, 1
        %s719 = smul.addr %s718, 4
        %s720 = smul.addr %s719, 4
        %s721 = scalar_lea.vmem %s4, %s720
        %p722 = scmp.lt.s32.totalorder %s36, 1
        %s723 = scalar_select %p722, %s36, 1
        %s724 = scalar_lea.vmem %s5, %s723
        %p725 = scmp.lt.s32.totalorder %s36, 1
        %s726 = scalar_select %p725, %s36, 1
        %s727 = smul.addr %s726, 4
        %s728 = smul.addr %s727, 4
        %s729 = scalar_lea.vmem %s6, %s728
        %p730 = scmp.lt.s32.totalorder %s36, 1
        %s731 = scalar_select %p730, %s36, 1
        %s732 = scalar_lea.vmem %s7, %s731
        %p733 = scmp.lt.s32.totalorder %s36, 1
        %s734 = scalar_select %p733, %s36, 1
        %s735 = scalar_lea.vmem %s8, %s734
        %p736 = scmp.lt.s32.totalorder %s36, 1
        %s737 = scalar_select %p736, %s36, 1
        %s738 = scalar_lea.vmem %s9, %s737
        %p739 = scmp.lt.s32.totalorder %s36, 1
        %s740 = scalar_select %p739, %s36, 1
        %s741 = smul.addr %s740, 4
        %s742 = smul.addr %s741, 4
        %s743 = scalar_lea.vmem %s10, %s742
        %p744 = scmp.lt.s32.totalorder %s36, 1
        %s745 = scalar_select %p744, %s36, 1
        %s746 = scalar_lea.vmem %s11, %s745
        %p747 = scmp.lt.s32.totalorder %s36, 1
        %s748 = scalar_select %p747, %s36, 1
        %s749 = smul.addr %s748, 16
        %s750 = smul.addr %s749, 4
        %s751 = scalar_lea.vmem %s12, %s750
        %p752 = scmp.lt.s32.totalorder %s36, 1
        %s753 = scalar_select %p752, %s36, 1
        %s754 = scalar_lea.vmem %s13, %s753
        %p755 = scmp.lt.s32.totalorder %s36, 1
        %s756 = scalar_select %p755, %s36, 1
        %s757 = scalar_lea.vmem %s14, %s756
        %p758 = scmp.lt.s32.totalorder %s36, 1
        %s759 = scalar_select %p758, %s36, 1
        %s760 = scalar_lea.vmem %s15, %s759
        %p762 = scmp.eq.s32.totalorder %s36, 0
        // Predicated region
        $region89: #{tpu_custom_call.1} parent=87 // pred_check
          %p763 = pneg %p762
        $region90: #{tpu_custom_call.1} parent=87 // pred_check_branch
          %765 = sbr.rel (%p763) target = $region92
        $region91: #{tpu_custom_call.1} parent=87 // pred_region
          %v766 = vld [vmem:[%s713] sm:$0xff]
          %v767 = vpack.c.bf16 %v766, %v766
          %v768 = vld [vmem:[%s3] sm:$0xf]
          %v769 = vld [vmem:[%s3 + $0x4] sm:$0xf]
          %v772 = vunpack.c.l.b16 %v768
          %v773 = vunpack.c.l.b16 %v769
          %v774 = vpack.c.b16 %v773, %v772
          %vm776 = vcmask 130048
          %v778 = vsel %vm776, %v767, 0
          %780 = vmatprep.subr.bf16.mxu0 0
          %781 = vmatpush1.bf16.msra.mxu0 0
          %782 = vmatprep.subr.bf16.mxu0 0
          %783 = vmatpush1.bf16.msra.mxu0 0
          %784 = vmatprep.subr.bf16.mxu0 0
          %785 = vmatpush1.bf16.msra.mxu0 0
          %786 = vmatprep.subr.bf16.mxu0 0
          %787 = vmatpush1.bf16.msra.mxu0 0
          %788 = vmatprep.subr.bf16.mxu0 0
          %789 = vmatpush1.bf16.msra.mxu0 0
          %790 = vmatprep.subr.bf16.mxu0 0
          %791 = vmatpush1.bf16.msra.mxu0 0
          %792 = vmatprep.subr.bf16.mxu0 0
          %793 = vmatpush1.bf16.msra.mxu0 0
          %794 = vmatprep.subr.bf16.mxu0 0
          %795 = vmatpush1.bf16.msra.mxu0 %v774
          %796 = vmatprep.subr.bf16.mxu0 0
          %797 = vmatpush2.bf16.msra.mxu0 0
          %798 = vmatprep.subr.bf16.mxu0 0
          %799 = vmatpush2.bf16.msra.mxu0 0
          %800 = vmatprep.subr.bf16.mxu0 0
          %801 = vmatpush2.bf16.msra.mxu0 0
          %802 = vmatprep.subr.bf16.mxu0 0
          %803 = vmatpush2.bf16.msra.mxu0 0
          %804 = vmatprep.subr.bf16.mxu0 0
          %805 = vmatpush2.bf16.msra.mxu0 0
          %806 = vmatprep.subr.bf16.mxu0 0
          %807 = vmatpush2.bf16.msra.mxu0 0
          %808 = vmatprep.subr.bf16.mxu0 0
          %809 = vmatpush2.bf16.msra.mxu0 0
          %810 = vmatprep.subr.bf16.mxu0 0
          %811 = vmatpush2.bf16.msra.mxu0 0
          %812 = vmatprep.mubr.bf16.mxu0 0
          %813 = vmatmul.mubr.bf16.gmra.mxu0 %v778
          %v814 = vpop.f32.mrf.mxu0
          %v815 = vadd.f32 0.0, %v814
          %v816 = vpop.f32.mrf.mxu0
          %v817 = vpop.f32.mrf.mxu0
          %v818 = vpop.f32.mrf.mxu0
          %819 = vdwg.mxu0
          %v820 = vld [vmem:[%s1] sm:$0xff]
          %v821 = vadd.f32 %v815, %v820
          %vm822 = vcmask 261120
          %823 = vst.msk [vmem:[#allocation2] sm:$0xff] %vm822, %v821
        $region92: #{tpu_custom_call.1} parent=87 // pred_fallthru
          _
        %v824 = vld [vmem:[#allocation2] sm:$0xff]
        %v825 = vpack.c.bf16 %v824, %v824
        %v826 = vld [vmem:[%s721] sm:$0xf]
        %v827 = vld [vmem:[%s721 + $0x4] sm:$0xf]
        %v828 = vld [vmem:[%s721 + $0x8] sm:$0xf]
        %v829 = vld [vmem:[%s721 + $0xc] sm:$0xf]
        %v830 = vld [vmem:[%s724] sm:$0x1]
        %v832 = vlaneseq
        %v833 = vshrl.u32 %v832, 7
        %v834 = vsub.s32 0, %v833
        %v835 = vrot.slane %v830, %v834
        %v841 = vunpack.c.l.b16 %v826
        %v842 = vunpack.c.l.b16 %v827
        %v843 = vunpack.c.l.b16 %v828
        %v844 = vunpack.c.l.b16 %v829
        %v845 = vpack.c.b16 %v842, %v841
        %v846 = vpack.c.b16 %v844, %v843
        %vm849 = vcmask 261120
        %v851 = vsel %vm849, %v825, 0
        %853 = vmatprep.subr.bf16.mxu0 0
        %854 = vmatpush1.bf16.msra.mxu0 0
        %855 = vmatprep.subr.bf16.mxu0 0
        %856 = vmatpush1.bf16.msra.mxu0 0
        %857 = vmatprep.subr.bf16.mxu0 0
        %858 = vmatpush1.bf16.msra.mxu0 0
        %859 = vmatprep.subr.bf16.mxu0 0
        %860 = vmatpush1.bf16.msra.mxu0 0
        %861 = vmatprep.subr.bf16.mxu0 0
        %862 = vmatpush1.bf16.msra.mxu0 0
        %863 = vmatprep.subr.bf16.mxu0 0
        %864 = vmatpush1.bf16.msra.mxu0 0
        %865 = vmatprep.subr.bf16.mxu0 0
        %866 = vmatpush1.bf16.msra.mxu0 %v846
        %867 = vmatprep.subr.bf16.mxu0 0
        %868 = vmatpush1.bf16.msra.mxu0 %v845
        %869 = vmatprep.subr.bf16.mxu0 0
        %870 = vmatpush2.bf16.msra.mxu0 0
        %871 = vmatprep.subr.bf16.mxu0 0
        %872 = vmatpush2.bf16.msra.mxu0 0
        %873 = vmatprep.subr.bf16.mxu0 0
        %874 = vmatpush2.bf16.msra.mxu0 0
        %875 = vmatprep.subr.bf16.mxu0 0
        %876 = vmatpush2.bf16.msra.mxu0 0
        %877 = vmatprep.subr.bf16.mxu0 0
        %878 = vmatpush2.bf16.msra.mxu0 0
        %879 = vmatprep.subr.bf16.mxu0 0
        %880 = vmatpush2.bf16.msra.mxu0 0
        %881 = vmatprep.subr.bf16.mxu0 0
        %882 = vmatpush2.bf16.msra.mxu0 0
        %883 = vmatprep.subr.bf16.mxu0 0
        %884 = vmatpush2.bf16.msra.mxu0 0
        %885 = vmatprep.mubr.bf16.mxu0 0
        %886 = vmatmul.mubr.bf16.gmra.mxu0 %v851
        %v887 = vpop.f32.mrf.mxu0
        %v888 = vadd.f32 %v835, %v887
        %v889 = vpop.f32.mrf.mxu0
        %v890 = vpop.f32.mrf.mxu0
        %v891 = vpop.f32.mrf.mxu0
        %892 = vdwg.mxu0
        %894 = vrot.lane.b32.xlu0 %v888, 120
        %v895 = vpop.permute.xlu0 %894
        %897 = vrot.lane.b32.xlu0 %v888, 112
        %v898 = vpop.permute.xlu0 %897
        %900 = vrot.lane.b32.xlu0 %v888, 104
        %v901 = vpop.permute.xlu0 %900
        %v903 = vpack.c.bf16 %v888, %v888
        %v904 = vpack.c.bf16 %v895, %v895
        %v905 = vpack.c.bf16 %v898, %v898
        %v906 = vpack.c.bf16 %v901, %v901
        %908 = vrot.lane.b32.xlu0 %v903, 96
        %v909 = vpop.permute.xlu0 %908
        %vm910 = vcmask 64512
        %v912 = vsel %vm910, %v903, 0
        %v915 = vsel %vm910, %v909, 0
        %917 = vmatprep.subr.bf16.mxu0 0
        %918 = vmatpush1.bf16.xpose.msra.mxu0 0
        %919 = vmatprep.subr.bf16.mxu0 0
        %920 = vmatpush1.bf16.xpose.msra.mxu0 0
        %921 = vmatprep.subr.bf16.mxu0 0
        %922 = vmatpush1.bf16.xpose.msra.mxu0 0
        %923 = vmatprep.subr.bf16.mxu0 0
        %924 = vmatpush1.bf16.xpose.msra.mxu0 0
        %925 = vmatprep.subr.bf16.mxu0 0
        %926 = vmatpush1.bf16.xpose.msra.mxu0 0
        %927 = vmatprep.subr.bf16.mxu0 0
        %928 = vmatpush1.bf16.xpose.msra.mxu0 0
        %929 = vmatprep.subr.bf16.mxu0 0
        %930 = vmatpush1.bf16.xpose.msra.mxu0 0
        %931 = vmatprep.subr.bf16.mxu0 0
        %932 = vmatpush1.bf16.xpose.msra.mxu0 %v915
        %933 = vmatprep.subr.bf16.mxu0 0
        %934 = vmatpush2.bf16.xpose.msra.mxu0 0
        %935 = vmatprep.subr.bf16.mxu0 0
        %936 = vmatpush2.bf16.xpose.msra.mxu0 0
        %937 = vmatprep.subr.bf16.mxu0 0
        %938 = vmatpush2.bf16.xpose.msra.mxu0 0
        %939 = vmatprep.subr.bf16.mxu0 0
        %940 = vmatpush2.bf16.xpose.msra.mxu0 0
        %941 = vmatprep.subr.bf16.mxu0 0
        %942 = vmatpush2.bf16.xpose.msra.mxu0 0
        %943 = vmatprep.subr.bf16.mxu0 0
        %944 = vmatpush2.bf16.xpose.msra.mxu0 0
        %945 = vmatprep.subr.bf16.mxu0 0
        %946 = vmatpush2.bf16.xpose.msra.mxu0 0
        %947 = vmatprep.subr.bf16.mxu0 0
        %948 = vmatpush2.bf16.xpose.msra.mxu0 0
        %949 = vmatprep.mubr.bf16.mxu0 0
        %950 = vmatmul.mubr.bf16.gmra.mxu0 %v912
        %v951 = vpop.f32.mrf.mxu0
        %v952 = vadd.f32 0.0, %v951
        %v953 = vpop.f32.mrf.mxu0
        %v954 = vpop.f32.mrf.mxu0
        %v955 = vpop.f32.mrf.mxu0
        %956 = vdwg.mxu0
        %958 = vrot.lane.b32.xlu0 %v904, 96
        %v959 = vpop.permute.xlu0 %958
        %v961 = vsel %vm910, %v904, 0
        %v964 = vsel %vm910, %v959, 0
        %966 = vmatprep.subr.bf16.mxu0 0
        %967 = vmatpush1.bf16.xpose.msra.mxu0 0
        %968 = vmatprep.subr.bf16.mxu0 0
        %969 = vmatpush1.bf16.xpose.msra.mxu0 0
        %970 = vmatprep.subr.bf16.mxu0 0
        %971 = vmatpush1.bf16.xpose.msra.mxu0 0
        %972 = vmatprep.subr.bf16.mxu0 0
        %973 = vmatpush1.bf16.xpose.msra.mxu0 0
        %974 = vmatprep.subr.bf16.mxu0 0
        %975 = vmatpush1.bf16.xpose.msra.mxu0 0
        %976 = vmatprep.subr.bf16.mxu0 0
        %977 = vmatpush1.bf16.xpose.msra.mxu0 0
        %978 = vmatprep.subr.bf16.mxu0 0
        %979 = vmatpush1.bf16.xpose.msra.mxu0 0
        %980 = vmatprep.subr.bf16.mxu0 0
        %981 = vmatpush1.bf16.xpose.msra.mxu0 %v964
        %982 = vmatprep.subr.bf16.mxu0 0
        %983 = vmatpush2.bf16.xpose.msra.mxu0 0
        %984 = vmatprep.subr.bf16.mxu0 0
        %985 = vmatpush2.bf16.xpose.msra.mxu0 0
        %986 = vmatprep.subr.bf16.mxu0 0
        %987 = vmatpush2.bf16.xpose.msra.mxu0 0
        %988 = vmatprep.subr.bf16.mxu0 0
        %989 = vmatpush2.bf16.xpose.msra.mxu0 0
        %990 = vmatprep.subr.bf16.mxu0 0
        %991 = vmatpush2.bf16.xpose.msra.mxu0 0
        %992 = vmatprep.subr.bf16.mxu0 0
        %993 = vmatpush2.bf16.xpose.msra.mxu0 0
        %994 = vmatprep.subr.bf16.mxu0 0
        %995 = vmatpush2.bf16.xpose.msra.mxu0 0
        %996 = vmatprep.subr.bf16.mxu0 0
        %997 = vmatpush2.bf16.xpose.msra.mxu0 0
        %998 = vmatprep.mubr.bf16.mxu0 0
        %999 = vmatmul.mubr.bf16.gmra.mxu0 %v961
        %v1000 = vpop.f32.mrf.mxu0
        %v1001 = vadd.f32 0.0, %v1000
        %v1002 = vpop.f32.mrf.mxu0
        %v1003 = vpop.f32.mrf.mxu0
        %v1004 = vpop.f32.mrf.mxu0
        %1005 = vdwg.mxu0
        %1007 = vrot.lane.b32.xlu0 %v905, 96
        %v1008 = vpop.permute.xlu0 %1007
        %v1010 = vsel %vm910, %v905, 0
        %v1013 = vsel %vm910, %v1008, 0
        %1015 = vmatprep.subr.bf16.mxu0 0
        %1016 = vmatpush1.bf16.xpose.msra.mxu0 0
        %1017 = vmatprep.subr.bf16.mxu0 0
        %1018 = vmatpush1.bf16.xpose.msra.mxu0 0
        %1019 = vmatprep.subr.bf16.mxu0 0
        %1020 = vmatpush1.bf16.xpose.msra.mxu0 0
        %1021 = vmatprep.subr.bf16.mxu0 0
        %1022 = vmatpush1.bf16.xpose.msra.mxu0 0
        %1023 = vmatprep.subr.bf16.mxu0 0
        %1024 = vmatpush1.bf16.xpose.msra.mxu0 0
        %1025 = vmatprep.subr.bf16.mxu0 0
        %1026 = vmatpush1.bf16.xpose.msra.mxu0 0
        %1027 = vmatprep.subr.bf16.mxu0 0
        %1028 = vmatpush1.bf16.xpose.msra.mxu0 0
        %1029 = vmatprep.subr.bf16.mxu0 0
        %1030 = vmatpush1.bf16.xpose.msra.mxu0 %v1013
        %1031 = vmatprep.subr.bf16.mxu0 0
        %1032 = vmatpush2.bf16.xpose.msra.mxu0 0
        %1033 = vmatprep.subr.bf16.mxu0 0
        %1034 = vmatpush2.bf16.xpose.msra.mxu0 0
        %1035 = vmatprep.subr.bf16.mxu0 0
        %1036 = vmatpush2.bf16.xpose.msra.mxu0 0
        %1037 = vmatprep.subr.bf16.mxu0 0
        %1038 = vmatpush2.bf16.xpose.msra.mxu0 0
        %1039 = vmatprep.subr.bf16.mxu0 0
        %1040 = vmatpush2.bf16.xpose.msra.mxu0 0
        %1041 = vmatprep.subr.bf16.mxu0 0
        %1042 = vmatpush2.bf16.xpose.msra.mxu0 0
        %1043 = vmatprep.subr.bf16.mxu0 0
        %1044 = vmatpush2.bf16.xpose.msra.mxu0 0
        %1045 = vmatprep.subr.bf16.mxu0 0
        %1046 = vmatpush2.bf16.xpose.msra.mxu0 0
        %1047 = vmatprep.mubr.bf16.mxu0 0
        %1048 = vmatmul.mubr.bf16.gmra.mxu0 %v1010
        %v1049 = vpop.f32.mrf.mxu0
        %v1050 = vadd.f32 0.0, %v1049
        %v1051 = vpop.f32.mrf.mxu0
        %v1052 = vpop.f32.mrf.mxu0
        %v1053 = vpop.f32.mrf.mxu0
        %1054 = vdwg.mxu0
        %1056 = vrot.lane.b32.xlu0 %v906, 96
        %v1057 = vpop.permute.xlu0 %1056
        %v1059 = vsel %vm910, %v906, 0
        %v1062 = vsel %vm910, %v1057, 0
        %1064 = vmatprep.subr.bf16.mxu0 0
        %1065 = vmatpush1.bf16.xpose.msra.mxu0 0
        %1066 = vmatprep.subr.bf16.mxu0 0
        %1067 = vmatpush1.bf16.xpose.msra.mxu0 0
        %1068 = vmatprep.subr.bf16.mxu0 0
        %1069 = vmatpush1.bf16.xpose.msra.mxu0 0
        %1070 = vmatprep.subr.bf16.mxu0 0
        %1071 = vmatpush1.bf16.xpose.msra.mxu0 0
        %1072 = vmatprep.subr.bf16.mxu0 0
        %1073 = vmatpush1.bf16.xpose.msra.mxu0 0
        %1074 = vmatprep.subr.bf16.mxu0 0
        %1075 = vmatpush1.bf16.xpose.msra.mxu0 0
        %1076 = vmatprep.subr.bf16.mxu0 0
        %1077 = vmatpush1.bf16.xpose.msra.mxu0 0
        %1078 = vmatprep.subr.bf16.mxu0 0
        %1079 = vmatpush1.bf16.xpose.msra.mxu0 %v1062
        %1080 = vmatprep.subr.bf16.mxu0 0
        %1081 = vmatpush2.bf16.xpose.msra.mxu0 0
        %1082 = vmatprep.subr.bf16.mxu0 0
        %1083 = vmatpush2.bf16.xpose.msra.mxu0 0
        %1084 = vmatprep.subr.bf16.mxu0 0
        %1085 = vmatpush2.bf16.xpose.msra.mxu0 0
        %1086 = vmatprep.subr.bf16.mxu0 0
        %1087 = vmatpush2.bf16.xpose.msra.mxu0 0
        %1088 = vmatprep.subr.bf16.mxu0 0
        %1089 = vmatpush2.bf16.xpose.msra.mxu0 0
        %1090 = vmatprep.subr.bf16.mxu0 0
        %1091 = vmatpush2.bf16.xpose.msra.mxu0 0
        %1092 = vmatprep.subr.bf16.mxu0 0
        %1093 = vmatpush2.bf16.xpose.msra.mxu0 0
        %1094 = vmatprep.subr.bf16.mxu0 0
        %1095 = vmatpush2.bf16.xpose.msra.mxu0 0
        %1096 = vmatprep.mubr.bf16.mxu0 0
        %1097 = vmatmul.mubr.bf16.gmra.mxu0 %v1059
        %v1098 = vpop.f32.mrf.mxu0
        %v1099 = vadd.f32 0.0, %v1098
        %v1100 = vpop.f32.mrf.mxu0
        %v1101 = vpop.f32.mrf.mxu0
        %v1102 = vpop.f32.mrf.mxu0
        %1103 = vdwg.mxu0
        %v1104 = vld [vmem:[%s716] sm:$0x1]
        %v1106 = vlaneseq
        %v1107 = vshrl.u32 %v1106, 7
        %v1108 = vsub.s32 0, %v1107
        %v1109 = vrot.slane %v1104, %v1108
        %v1111 = vadd.f32 %v952, %v1109
        %v1112 = vadd.f32 %v1001, %v1109
        %v1113 = vadd.f32 %v1050, %v1109
        %v1114 = vadd.f32 %v1099, %v1109
        %v1115 = vsel %vm910, %v1111, -inf
        %1116 = vmax.xlane.f32.xlu0 %v1115
        %v1117 = vpop.xlane.xlu0 %1116
        %v1118 = vsel %vm910, %v1112, -inf
        %1119 = vmax.xlane.f32.xlu0 %v1118
        %v1120 = vpop.xlane.xlu0 %1119
        %v1121 = vsel %vm910, %v1113, -inf
        %1122 = vmax.xlane.f32.xlu0 %v1121
        %v1123 = vpop.xlane.xlu0 %1122
        %v1124 = vsel %vm910, %v1114, -inf
        %1125 = vmax.xlane.f32.xlu0 %v1124
        %v1126 = vpop.xlane.xlu0 %1125
        %v1127 = vsub.f32 %v1111, %v1117
        %v1128 = vsub.f32 %v1112, %v1120
        %v1129 = vsub.f32 %v1113, %v1123
        %v1130 = vsub.f32 %v1114, %v1126
        %v1131 = vmul.f32 %v1127, 1.442695
        %v1132 = vpow.pop %v1131
        %v1133 = vmul.f32 %v1128, 1.442695
        %v1134 = vpow.pop %v1133
        %v1135 = vmul.f32 %v1129, 1.442695
        %v1136 = vpow.pop %v1135
        %v1137 = vmul.f32 %v1130, 1.442695
        %v1138 = vpow.pop %v1137
        %v1139 = vsel %vm910, %v1132, 0.0
        %1140 = vadd.xlane.f32.xlu0 %v1139
        %v1141 = vpop.xlane.xlu0 %1140
        %v1142 = vsel %vm910, %v1134, 0.0
        %1143 = vadd.xlane.f32.xlu0 %v1142
        %v1144 = vpop.xlane.xlu0 %1143
        %v1145 = vsel %vm910, %v1136, 0.0
        %1146 = vadd.xlane.f32.xlu0 %v1145
        %v1147 = vpop.xlane.xlu0 %1146
        %v1148 = vsel %vm910, %v1138, 0.0
        %1149 = vadd.xlane.f32.xlu0 %v1148
        %v1150 = vpop.xlane.xlu0 %1149
        %v1151 = vrcp.pop %v1141
        %v1152 = vrcp.pop %v1144
        %v1153 = vrcp.pop %v1147
        %v1154 = vrcp.pop %v1150
        %v1155 = vmul.f32 %v1132, %v1151
        %v1156 = vmul.f32 %v1134, %v1152
        %v1157 = vmul.f32 %v1136, %v1153
        %v1158 = vmul.f32 %v1138, %v1154
        %v1159 = vpack.c.bf16 %v1155, %v1155
        %v1160 = vpack.c.bf16 %v1156, %v1156
        %v1161 = vpack.c.bf16 %v1157, %v1157
        %v1162 = vpack.c.bf16 %v1158, %v1158
        %1163 = vrot.lane.b32.xlu0 %v903, 64
        %v1164 = vpop.permute.xlu0 %1163
        %v1166 = vsel %vm910, %v1159, 0
        %vm1168 = vcmask 1043456
        %v1170 = vsel %vm1168, %v1164, 0
        %1172 = vmatprep.subr.bf16.mxu0 0
        %1173 = vmatpush1.bf16.msra.mxu0 0
        %1174 = vmatprep.subr.bf16.mxu0 0
        %1175 = vmatpush1.bf16.msra.mxu0 0
        %1176 = vmatprep.subr.bf16.mxu0 0
        %1177 = vmatpush1.bf16.msra.mxu0 0
        %1178 = vmatprep.subr.bf16.mxu0 0
        %1179 = vmatpush1.bf16.msra.mxu0 0
        %1180 = vmatprep.subr.bf16.mxu0 0
        %1181 = vmatpush1.bf16.msra.mxu0 0
        %1182 = vmatprep.subr.bf16.mxu0 0
        %1183 = vmatpush1.bf16.msra.mxu0 0
        %1184 = vmatprep.subr.bf16.mxu0 0
        %1185 = vmatpush1.bf16.msra.mxu0 0
        %1186 = vmatprep.subr.bf16.mxu0 0
        %1187 = vmatpush1.bf16.msra.mxu0 %v1170
        %1188 = vmatprep.subr.bf16.mxu0 0
        %1189 = vmatpush2.bf16.msra.mxu0 0
        %1190 = vmatprep.subr.bf16.mxu0 0
        %1191 = vmatpush2.bf16.msra.mxu0 0
        %1192 = vmatprep.subr.bf16.mxu0 0
        %1193 = vmatpush2.bf16.msra.mxu0 0
        %1194 = vmatprep.subr.bf16.mxu0 0
        %1195 = vmatpush2.bf16.msra.mxu0 0
        %1196 = vmatprep.subr.bf16.mxu0 0
        %1197 = vmatpush2.bf16.msra.mxu0 0
        %1198 = vmatprep.subr.bf16.mxu0 0
        %1199 = vmatpush2.bf16.msra.mxu0 0
        %1200 = vmatprep.subr.bf16.mxu0 0
        %1201 = vmatpush2.bf16.msra.mxu0 0
        %1202 = vmatprep.subr.bf16.mxu0 0
        %1203 = vmatpush2.bf16.msra.mxu0 0
        %1204 = vmatprep.mubr.bf16.mxu0 0
        %1205 = vmatmul.mubr.bf16.gmra.mxu0 %v1166
        %v1206 = vpop.f32.mrf.mxu0
        %v1207 = vadd.f32 0.0, %v1206
        %v1208 = vpop.f32.mrf.mxu0
        %v1209 = vpop.f32.mrf.mxu0
        %v1210 = vpop.f32.mrf.mxu0
        %1211 = vdwg.mxu0
        %1212 = vrot.lane.b32.xlu0 %v904, 64
        %v1213 = vpop.permute.xlu0 %1212
        %v1215 = vsel %vm910, %v1160, 0
        %v1218 = vsel %vm1168, %v1213, 0
        %1220 = vmatprep.subr.bf16.mxu0 0
        %1221 = vmatpush1.bf16.msra.mxu0 0
        %1222 = vmatprep.subr.bf16.mxu0 0
        %1223 = vmatpush1.bf16.msra.mxu0 0
        %1224 = vmatprep.subr.bf16.mxu0 0
        %1225 = vmatpush1.bf16.msra.mxu0 0
        %1226 = vmatprep.subr.bf16.mxu0 0
        %1227 = vmatpush1.bf16.msra.mxu0 0
        %1228 = vmatprep.subr.bf16.mxu0 0
        %1229 = vmatpush1.bf16.msra.mxu0 0
        %1230 = vmatprep.subr.bf16.mxu0 0
        %1231 = vmatpush1.bf16.msra.mxu0 0
        %1232 = vmatprep.subr.bf16.mxu0 0
        %1233 = vmatpush1.bf16.msra.mxu0 0
        %1234 = vmatprep.subr.bf16.mxu0 0
        %1235 = vmatpush1.bf16.msra.mxu0 %v1218
        %1236 = vmatprep.subr.bf16.mxu0 0
        %1237 = vmatpush2.bf16.msra.mxu0 0
        %1238 = vmatprep.subr.bf16.mxu0 0
        %1239 = vmatpush2.bf16.msra.mxu0 0
        %1240 = vmatprep.subr.bf16.mxu0 0
        %1241 = vmatpush2.bf16.msra.mxu0 0
        %1242 = vmatprep.subr.bf16.mxu0 0
        %1243 = vmatpush2.bf16.msra.mxu0 0
        %1244 = vmatprep.subr.bf16.mxu0 0
        %1245 = vmatpush2.bf16.msra.mxu0 0
        %1246 = vmatprep.subr.bf16.mxu0 0
        %1247 = vmatpush2.bf16.msra.mxu0 0
        %1248 = vmatprep.subr.bf16.mxu0 0
        %1249 = vmatpush2.bf16.msra.mxu0 0
        %1250 = vmatprep.subr.bf16.mxu0 0
        %1251 = vmatpush2.bf16.msra.mxu0 0
        %1252 = vmatprep.mubr.bf16.mxu0 0
        %1253 = vmatmul.mubr.bf16.gmra.mxu0 %v1215
        %v1254 = vpop.f32.mrf.mxu0
        %v1255 = vadd.f32 0.0, %v1254
        %v1256 = vpop.f32.mrf.mxu0
        %v1257 = vpop.f32.mrf.mxu0
        %v1258 = vpop.f32.mrf.mxu0
        %1259 = vdwg.mxu0
        %1260 = vrot.lane.b32.xlu0 %v905, 64
        %v1261 = vpop.permute.xlu0 %1260
        %v1263 = vsel %vm910, %v1161, 0
        %v1266 = vsel %vm1168, %v1261, 0
        %1268 = vmatprep.subr.bf16.mxu0 0
        %1269 = vmatpush1.bf16.msra.mxu0 0
        %1270 = vmatprep.subr.bf16.mxu0 0
        %1271 = vmatpush1.bf16.msra.mxu0 0
        %1272 = vmatprep.subr.bf16.mxu0 0
        %1273 = vmatpush1.bf16.msra.mxu0 0
        %1274 = vmatprep.subr.bf16.mxu0 0
        %1275 = vmatpush1.bf16.msra.mxu0 0
        %1276 = vmatprep.subr.bf16.mxu0 0
        %1277 = vmatpush1.bf16.msra.mxu0 0
        %1278 = vmatprep.subr.bf16.mxu0 0
        %1279 = vmatpush1.bf16.msra.mxu0 0
        %1280 = vmatprep.subr.bf16.mxu0 0
        %1281 = vmatpush1.bf16.msra.mxu0 0
        %1282 = vmatprep.subr.bf16.mxu0 0
        %1283 = vmatpush1.bf16.msra.mxu0 %v1266
        %1284 = vmatprep.subr.bf16.mxu0 0
        %1285 = vmatpush2.bf16.msra.mxu0 0
        %1286 = vmatprep.subr.bf16.mxu0 0
        %1287 = vmatpush2.bf16.msra.mxu0 0
        %1288 = vmatprep.subr.bf16.mxu0 0
        %1289 = vmatpush2.bf16.msra.mxu0 0
        %1290 = vmatprep.subr.bf16.mxu0 0
        %1291 = vmatpush2.bf16.msra.mxu0 0
        %1292 = vmatprep.subr.bf16.mxu0 0
        %1293 = vmatpush2.bf16.msra.mxu0 0
        %1294 = vmatprep.subr.bf16.mxu0 0
        %1295 = vmatpush2.bf16.msra.mxu0 0
        %1296 = vmatprep.subr.bf16.mxu0 0
        %1297 = vmatpush2.bf16.msra.mxu0 0
        %1298 = vmatprep.subr.bf16.mxu0 0
        %1299 = vmatpush2.bf16.msra.mxu0 0
        %1300 = vmatprep.mubr.bf16.mxu0 0
        %1301 = vmatmul.mubr.bf16.gmra.mxu0 %v1263
        %v1302 = vpop.f32.mrf.mxu0
        %v1303 = vadd.f32 0.0, %v1302
        %v1304 = vpop.f32.mrf.mxu0
        %v1305 = vpop.f32.mrf.mxu0
        %v1306 = vpop.f32.mrf.mxu0
        %1307 = vdwg.mxu0
        %1308 = vrot.lane.b32.xlu0 %v906, 64
        %v1309 = vpop.permute.xlu0 %1308
        %v1311 = vsel %vm910, %v1162, 0
        %v1314 = vsel %vm1168, %v1309, 0
        %1316 = vmatprep.subr.bf16.mxu0 0
        %1317 = vmatpush1.bf16.msra.mxu0 0
        %1318 = vmatprep.subr.bf16.mxu0 0
        %1319 = vmatpush1.bf16.msra.mxu0 0
        %1320 = vmatprep.subr.bf16.mxu0 0
        %1321 = vmatpush1.bf16.msra.mxu0 0
        %1322 = vmatprep.subr.bf16.mxu0 0
        %1323 = vmatpush1.bf16.msra.mxu0 0
        %1324 = vmatprep.subr.bf16.mxu0 0
        %1325 = vmatpush1.bf16.msra.mxu0 0
        %1326 = vmatprep.subr.bf16.mxu0 0
        %1327 = vmatpush1.bf16.msra.mxu0 0
        %1328 = vmatprep.subr.bf16.mxu0 0
        %1329 = vmatpush1.bf16.msra.mxu0 0
        %1330 = vmatprep.subr.bf16.mxu0 0
        %1331 = vmatpush1.bf16.msra.mxu0 %v1314
        %1332 = vmatprep.subr.bf16.mxu0 0
        %1333 = vmatpush2.bf16.msra.mxu0 0
        %1334 = vmatprep.subr.bf16.mxu0 0
        %1335 = vmatpush2.bf16.msra.mxu0 0
        %1336 = vmatprep.subr.bf16.mxu0 0
        %1337 = vmatpush2.bf16.msra.mxu0 0
        %1338 = vmatprep.subr.bf16.mxu0 0
        %1339 = vmatpush2.bf16.msra.mxu0 0
        %1340 = vmatprep.subr.bf16.mxu0 0
        %1341 = vmatpush2.bf16.msra.mxu0 0
        %1342 = vmatprep.subr.bf16.mxu0 0
        %1343 = vmatpush2.bf16.msra.mxu0 0
        %1344 = vmatprep.subr.bf16.mxu0 0
        %1345 = vmatpush2.bf16.msra.mxu0 0
        %1346 = vmatprep.subr.bf16.mxu0 0
        %1347 = vmatpush2.bf16.msra.mxu0 0
        %1348 = vmatprep.mubr.bf16.mxu0 0
        %1349 = vmatmul.mubr.bf16.gmra.mxu0 %v1311
        %v1350 = vpop.f32.mrf.mxu0
        %v1351 = vadd.f32 0.0, %v1350
        %v1352 = vpop.f32.mrf.mxu0
        %v1353 = vpop.f32.mrf.mxu0
        %v1354 = vpop.f32.mrf.mxu0
        %1355 = vdwg.mxu0
        %v1356 = vpack.c.bf16 %v1207, %v1207
        %v1357 = vpack.c.bf16 %v1255, %v1255
        %v1358 = vpack.c.bf16 %v1303, %v1303
        %v1359 = vpack.c.bf16 %v1351, %v1351
        %1361 = vrot.lane.b32.xlu0 %v1357, 8
        %v1362 = vpop.permute.xlu0 %1361
        %1364 = vrot.lane.b32.xlu0 %v1358, 16
        %v1365 = vpop.permute.xlu0 %1364
        %1367 = vrot.lane.b32.xlu0 %v1359, 24
        %v1368 = vpop.permute.xlu0 %1367
        %v1371 = vsel %vm910, %v1356, %v1362
        %vm1372 = vcmask 130048
        %v1374 = vsel %vm1372, %v1371, %v1365
        %vm1375 = vcmask 195584
        %v1377 = vsel %vm1375, %v1374, %v1368
        %v1378 = vld [vmem:[%s729] sm:$0xf]
        %v1379 = vld [vmem:[%s729 + $0x4] sm:$0xf]
        %v1380 = vld [vmem:[%s729 + $0x8] sm:$0xf]
        %v1381 = vld [vmem:[%s729 + $0xc] sm:$0xf]
        %v1382 = vld [vmem:[%s732] sm:$0x1]
        %v1384 = vlaneseq
        %v1385 = vshrl.u32 %v1384, 7
        %v1386 = vsub.s32 0, %v1385
        %v1387 = vrot.slane %v1382, %v1386
        %v1393 = vunpack.c.l.b16 %v1378
        %v1394 = vunpack.c.l.b16 %v1379
        %v1395 = vunpack.c.l.b16 %v1380
        %v1396 = vunpack.c.l.b16 %v1381
        %v1397 = vpack.c.b16 %v1394, %v1393
        %v1398 = vpack.c.b16 %v1396, %v1395
        %v1401 = vsel %vm849, %v1377, 0
        %1403 = vmatprep.subr.bf16.mxu0 0
        %1404 = vmatpush1.bf16.msra.mxu0 0
        %1405 = vmatprep.subr.bf16.mxu0 0
        %1406 = vmatpush1.bf16.msra.mxu0 0
        %1407 = vmatprep.subr.bf16.mxu0 0
        %1408 = vmatpush1.bf16.msra.mxu0 0
        %1409 = vmatprep.subr.bf16.mxu0 0
        %1410 = vmatpush1.bf16.msra.mxu0 0
        %1411 = vmatprep.subr.bf16.mxu0 0
        %1412 = vmatpush1.bf16.msra.mxu0 0
        %1413 = vmatprep.subr.bf16.mxu0 0
        %1414 = vmatpush1.bf16.msra.mxu0 0
        %1415 = vmatprep.subr.bf16.mxu0 0
        %1416 = vmatpush1.bf16.msra.mxu0 %v1398
        %1417 = vmatprep.subr.bf16.mxu0 0
        %1418 = vmatpush1.bf16.msra.mxu0 %v1397
        %1419 = vmatprep.subr.bf16.mxu0 0
        %1420 = vmatpush2.bf16.msra.mxu0 0
        %1421 = vmatprep.subr.bf16.mxu0 0
        %1422 = vmatpush2.bf16.msra.mxu0 0
        %1423 = vmatprep.subr.bf16.mxu0 0
        %1424 = vmatpush2.bf16.msra.mxu0 0
        %1425 = vmatprep.subr.bf16.mxu0 0
        %1426 = vmatpush2.bf16.msra.mxu0 0
        %1427 = vmatprep.subr.bf16.mxu0 0
        %1428 = vmatpush2.bf16.msra.mxu0 0
        %1429 = vmatprep.subr.bf16.mxu0 0
        %1430 = vmatpush2.bf16.msra.mxu0 0
        %1431 = vmatprep.subr.bf16.mxu0 0
        %1432 = vmatpush2.bf16.msra.mxu0 0
        %1433 = vmatprep.subr.bf16.mxu0 0
        %1434 = vmatpush2.bf16.msra.mxu0 0
        %1435 = vmatprep.mubr.bf16.mxu0 0
        %1436 = vmatmul.mubr.bf16.gmra.mxu0 %v1401
        %v1437 = vpop.f32.mrf.mxu0
        %v1438 = vadd.f32 %v1387, %v1437
        %v1439 = vpop.f32.mrf.mxu0
        %v1440 = vpop.f32.mrf.mxu0
        %v1441 = vpop.f32.mrf.mxu0
        %1442 = vdwg.mxu0
        %v1443 = vld [vmem:[%s735] sm:$0x1]
        %v1444 = vld [vmem:[%s738] sm:$0x1]
        %v1445 = vsel %vm849, %v1438, 0.0
        %1446 = vadd.xlane.f32.xlu0 %v1445
        %v1447 = vpop.xlane.xlu0 %1446
        %v1448 = vrcp.pop 32.0
        %v1449 = vmul.f32 %v1447, %v1448
        %v1450 = vsub.f32 %v1438, %v1449
        %v1451 = vmul.f32 %v1450, %v1450
        %v1452 = vsel %vm849, %v1451, 0.0
        %1453 = vadd.xlane.f32.xlu0 %v1452
        %v1454 = vpop.xlane.xlu0 %1453
        %v1455 = vmul.f32 %v1454, %v1448
        %v1456 = vadd.f32 %v1455, 1e-05
        %v1457 = vrsqrt.pop %v1456
        %v1458 = vmul.f32 %v1450, %v1457
        %v1460 = vlaneseq
        %v1461 = vshrl.u32 %v1460, 7
        %v1462 = vsub.s32 0, %v1461
        %v1463 = vrot.slane %v1443, %v1462
        %v1465 = vmul.f32 %v1458, %v1463
        %v1467 = vlaneseq
        %v1468 = vshrl.u32 %v1467, 7
        %v1469 = vsub.s32 0, %v1468
        %v1470 = vrot.slane %v1444, %v1469
        %v1472 = vadd.f32 %v1465, %v1470
        %v1473 = vadd.f32 %v824, %v1472
        %v1474 = vpack.c.bf16 %v1473, %v1473
        %v1475 = vld [vmem:[%s743] sm:$0xf]
        %v1476 = vld [vmem:[%s743 + $0x4] sm:$0xf]
        %v1477 = vld [vmem:[%s743 + $0x8] sm:$0xf]
        %v1478 = vld [vmem:[%s743 + $0xc] sm:$0xf]
        %v1479 = vld [vmem:[%s746] sm:$0x1]
        %v1481 = vlaneseq
        %v1482 = vshrl.u32 %v1481, 7
        %v1483 = vsub.s32 0, %v1482
        %v1484 = vrot.slane %v1479, %v1483
        %v1490 = vunpack.c.l.b16 %v1475
        %v1491 = vunpack.c.l.b16 %v1476
        %v1492 = vunpack.c.l.b16 %v1477
        %v1493 = vunpack.c.l.b16 %v1478
        %v1494 = vpack.c.b16 %v1491, %v1490
        %v1495 = vpack.c.b16 %v1493, %v1492
        %v1499 = vsel %vm849, %v1474, 0
        %1501 = vmatprep.subr.bf16.mxu0 0
        %1502 = vmatpush1.bf16.msra.mxu0 0
        %1503 = vmatprep.subr.bf16.mxu0 0
        %1504 = vmatpush1.bf16.msra.mxu0 0
        %1505 = vmatprep.subr.bf16.mxu0 0
        %1506 = vmatpush1.bf16.msra.mxu0 0
        %1507 = vmatprep.subr.bf16.mxu0 0
        %1508 = vmatpush1.bf16.msra.mxu0 0
        %1509 = vmatprep.subr.bf16.mxu0 0
        %1510 = vmatpush1.bf16.msra.mxu0 0
        %1511 = vmatprep.subr.bf16.mxu0 0
        %1512 = vmatpush1.bf16.msra.mxu0 0
        %1513 = vmatprep.subr.bf16.mxu0 0
        %1514 = vmatpush1.bf16.msra.mxu0 %v1495
        %1515 = vmatprep.subr.bf16.mxu0 0
        %1516 = vmatpush1.bf16.msra.mxu0 %v1494
        %1517 = vmatprep.subr.bf16.mxu0 0
        %1518 = vmatpush2.bf16.msra.mxu0 0
        %1519 = vmatprep.subr.bf16.mxu0 0
        %1520 = vmatpush2.bf16.msra.mxu0 0
        %1521 = vmatprep.subr.bf16.mxu0 0
        %1522 = vmatpush2.bf16.msra.mxu0 0
        %1523 = vmatprep.subr.bf16.mxu0 0
        %1524 = vmatpush2.bf16.msra.mxu0 0
        %1525 = vmatprep.subr.bf16.mxu0 0
        %1526 = vmatpush2.bf16.msra.mxu0 0
        %1527 = vmatprep.subr.bf16.mxu0 0
        %1528 = vmatpush2.bf16.msra.mxu0 0
        %1529 = vmatprep.subr.bf16.mxu0 0
        %1530 = vmatpush2.bf16.msra.mxu0 0
        %1531 = vmatprep.subr.bf16.mxu0 0
        %1532 = vmatpush2.bf16.msra.mxu0 0
        %1533 = vmatprep.mubr.bf16.mxu0 0
        %1534 = vmatmul.mubr.bf16.gmra.mxu0 %v1499
        %v1535 = vpop.f32.mrf.mxu0
        %v1536 = vadd.f32 %v1484, %v1535
        %v1537 = vpop.f32.mrf.mxu0
        %v1538 = vpop.f32.mrf.mxu0
        %v1539 = vpop.f32.mrf.mxu0
        %1540 = vdwg.mxu0
        %v1541 = vpack.c.bf16 %v1536, %v1536
        %v1542 = vmax.bf16 %v1541, 0
        %v1543 = vld [vmem:[%s751] sm:$0xf]
        %v1544 = vld [vmem:[%s751 + $0x4] sm:$0xf]
        %v1545 = vld [vmem:[%s751 + $0x8] sm:$0xf]
        %v1546 = vld [vmem:[%s751 + $0xc] sm:$0xf]
        %v1547 = vld [vmem:[%s751 + $0x10] sm:$0xf]
        %v1548 = vld [vmem:[%s751 + $0x14] sm:$0xf]
        %v1549 = vld [vmem:[%s751 + $0x18] sm:$0xf]
        %v1550 = vld [vmem:[%s751 + $0x1c] sm:$0xf]
        %v1551 = vld [vmem:[%s751 + $0x20] sm:$0xf]
        %v1552 = vld [vmem:[%s751 + $0x24] sm:$0xf]
        %v1553 = vld [vmem:[%s751 + $0x28] sm:$0xf]
        %v1554 = vld [vmem:[%s751 + $0x2c] sm:$0xf]
        %v1555 = vld [vmem:[%s751 + $0x30] sm:$0xf]
        %v1556 = vld [vmem:[%s751 + $0x34] sm:$0xf]
        %v1557 = vld [vmem:[%s751 + $0x38] sm:$0xf]
        %v1558 = vld [vmem:[%s751 + $0x3c] sm:$0xf]
        %v1559 = vld [vmem:[%s754] sm:$0x1]
        %v1561 = vlaneseq
        %v1562 = vshrl.u32 %v1561, 7
        %v1563 = vsub.s32 0, %v1562
        %v1564 = vrot.slane %v1559, %v1563
        %v1582 = vunpack.c.l.b16 %v1543
        %v1583 = vunpack.c.l.b16 %v1544
        %v1584 = vunpack.c.l.b16 %v1545
        %v1585 = vunpack.c.l.b16 %v1546
        %v1586 = vunpack.c.l.b16 %v1547
        %v1587 = vunpack.c.l.b16 %v1548
        %v1588 = vunpack.c.l.b16 %v1549
        %v1589 = vunpack.c.l.b16 %v1550
        %v1590 = vunpack.c.l.b16 %v1551
        %v1591 = vunpack.c.l.b16 %v1552
        %v1592 = vunpack.c.l.b16 %v1553
        %v1593 = vunpack.c.l.b16 %v1554
        %v1594 = vunpack.c.l.b16 %v1555
        %v1595 = vunpack.c.l.b16 %v1556
        %v1596 = vunpack.c.l.b16 %v1557
        %v1597 = vunpack.c.l.b16 %v1558
        %v1598 = vpack.c.b16 %v1583, %v1582
        %v1599 = vpack.c.b16 %v1585, %v1584
        %v1600 = vpack.c.b16 %v1587, %v1586
        %v1601 = vpack.c.b16 %v1589, %v1588
        %v1602 = vpack.c.b16 %v1591, %v1590
        %v1603 = vpack.c.b16 %v1593, %v1592
        %v1604 = vpack.c.b16 %v1595, %v1594
        %v1605 = vpack.c.b16 %v1597, %v1596
        %1614 = vmatprep.subr.bf16.mxu0 0
        %1615 = vmatpush1.bf16.msra.mxu0 %v1605
        %1616 = vmatprep.subr.bf16.mxu0 0
        %1617 = vmatpush1.bf16.msra.mxu0 %v1604
        %1618 = vmatprep.subr.bf16.mxu0 0
        %1619 = vmatpush1.bf16.msra.mxu0 %v1603
        %1620 = vmatprep.subr.bf16.mxu0 0
        %1621 = vmatpush1.bf16.msra.mxu0 %v1602
        %1622 = vmatprep.subr.bf16.mxu0 0
        %1623 = vmatpush1.bf16.msra.mxu0 %v1601
        %1624 = vmatprep.subr.bf16.mxu0 0
        %1625 = vmatpush1.bf16.msra.mxu0 %v1600
        %1626 = vmatprep.subr.bf16.mxu0 0
        %1627 = vmatpush1.bf16.msra.mxu0 %v1599
        %1628 = vmatprep.subr.bf16.mxu0 0
        %1629 = vmatpush1.bf16.msra.mxu0 %v1598
        %1630 = vmatprep.subr.bf16.mxu0 0
        %1631 = vmatpush2.bf16.msra.mxu0 0
        %1632 = vmatprep.subr.bf16.mxu0 0
        %1633 = vmatpush2.bf16.msra.mxu0 0
        %1634 = vmatprep.subr.bf16.mxu0 0
        %1635 = vmatpush2.bf16.msra.mxu0 0
        %1636 = vmatprep.subr.bf16.mxu0 0
        %1637 = vmatpush2.bf16.msra.mxu0 0
        %1638 = vmatprep.subr.bf16.mxu0 0
        %1639 = vmatpush2.bf16.msra.mxu0 0
        %1640 = vmatprep.subr.bf16.mxu0 0
        %1641 = vmatpush2.bf16.msra.mxu0 0
        %1642 = vmatprep.subr.bf16.mxu0 0
        %1643 = vmatpush2.bf16.msra.mxu0 0
        %1644 = vmatprep.subr.bf16.mxu0 0
        %1645 = vmatpush2.bf16.msra.mxu0 0
        %1646 = vmatprep.mubr.bf16.mxu0 0
        %1647 = vmatmul.mubr.bf16.gmra.mxu0 %v1542
        %v1648 = vpop.f32.mrf.mxu0
        %v1649 = vadd.f32 %v1564, %v1648
        %v1650 = vpop.f32.mrf.mxu0
        %v1651 = vpop.f32.mrf.mxu0
        %v1652 = vpop.f32.mrf.mxu0
        %1653 = vdwg.mxu0
        %v1654 = vld [vmem:[%s757] sm:$0x1]
        %v1655 = vld [vmem:[%s760] sm:$0x1]
        %v1656 = vsel %vm849, %v1649, 0.0
        %1657 = vadd.xlane.f32.xlu0 %v1656
        %v1658 = vpop.xlane.xlu0 %1657
        %v1659 = vmul.f32 %v1658, %v1448
        %v1660 = vsub.f32 %v1649, %v1659
        %v1661 = vmul.f32 %v1660, %v1660
        %v1662 = vsel %vm849, %v1661, 0.0
        %1663 = vadd.xlane.f32.xlu0 %v1662
        %v1664 = vpop.xlane.xlu0 %1663
        %v1665 = vmul.f32 %v1664, %v1448
        %v1666 = vadd.f32 %v1665, 1e-05
        %v1667 = vrsqrt.pop %v1666
        %v1668 = vmul.f32 %v1660, %v1667
        %v1670 = vlaneseq
        %v1671 = vshrl.u32 %v1670, 7
        %v1672 = vsub.s32 0, %v1671
        %v1673 = vrot.slane %v1654, %v1672
        %v1675 = vmul.f32 %v1668, %v1673
        %v1677 = vlaneseq
        %v1678 = vshrl.u32 %v1677, 7
        %v1679 = vsub.s32 0, %v1678
        %v1680 = vrot.slane %v1655, %v1679
        %v1682 = vadd.f32 %v1675, %v1680
        %v1683 = vadd.f32 %v1473, %v1682
        %1684 = vst.msk [vmem:[#allocation2] sm:$0xff] %vm849, %v1683
        %p1685 = scmp.eq.s32.totalorder %s36, 1
        // Predicated region
        $region93: #{tpu_custom_call.1} parent=87 // pred_check
          %p1686 = pneg %p1685
        $region94: #{tpu_custom_call.1} parent=87 // pred_check_branch
          %1688 = sbr.rel (%p1686) target = $region96
        $region95: #{tpu_custom_call.1} parent=87 // pred_region
          %v1689 = vsel %vm849, %v1683, 0.0
          %v1690 = vrot.slane %v1689, 4
          %v1691 = vadd.f32 %v1689, %v1690
          %v1692 = vrot.slane %v1691, 2
          %v1693 = vadd.f32 %v1691, %v1692
          %v1694 = vrot.slane %v1693, 1
          %v1695 = vadd.f32 %v1693, %v1694
          %v1696 = vmul.f32 %v1695, 0.125
          %v1697 = vpack.c.bf16 %v1696, %v1696
          %v1698 = vld [vmem:[%s16] sm:$0xf]
          %v1699 = vld [vmem:[%s16 + $0x4] sm:$0xf]
          %v1700 = vld [vmem:[%s16 + $0x8] sm:$0xf]
          %v1701 = vld [vmem:[%s16 + $0xc] sm:$0xf]
          %v1706 = vunpack.c.l.b16 %v1698
          %v1707 = vunpack.c.l.b16 %v1699
          %v1708 = vunpack.c.l.b16 %v1700
          %v1709 = vunpack.c.l.b16 %v1701
          %v1710 = vpack.c.b16 %v1707, %v1706
          %v1711 = vpack.c.b16 %v1709, %v1708
          %v1715 = vsel %vm849, %v1697, 0
          %1717 = vmatprep.subr.bf16.mxu0 0
          %1718 = vmatpush1.bf16.msra.mxu0 0
          %1719 = vmatprep.subr.bf16.mxu0 0
          %1720 = vmatpush1.bf16.msra.mxu0 0
          %1721 = vmatprep.subr.bf16.mxu0 0
          %1722 = vmatpush1.bf16.msra.mxu0 0
          %1723 = vmatprep.subr.bf16.mxu0 0
          %1724 = vmatpush1.bf16.msra.mxu0 0
          %1725 = vmatprep.subr.bf16.mxu0 0
          %1726 = vmatpush1.bf16.msra.mxu0 0
          %1727 = vmatprep.subr.bf16.mxu0 0
          %1728 = vmatpush1.bf16.msra.mxu0 0
          %1729 = vmatprep.subr.bf16.mxu0 0
          %1730 = vmatpush1.bf16.msra.mxu0 %v1711
          %1731 = vmatprep.subr.bf16.mxu0 0
          %1732 = vmatpush1.bf16.msra.mxu0 %v1710
          %1733 = vmatprep.subr.bf16.mxu0 0
          %1734 = vmatpush2.bf16.msra.mxu0 0
          %1735 = vmatprep.subr.bf16.mxu0 0
          %1736 = vmatpush2.bf16.msra.mxu0 0
          %1737 = vmatprep.subr.bf16.mxu0 0
          %1738 = vmatpush2.bf16.msra.mxu0 0
          %1739 = vmatprep.subr.bf16.mxu0 0
          %1740 = vmatpush2.bf16.msra.mxu0 0
          %1741 = vmatprep.subr.bf16.mxu0 0
          %1742 = vmatpush2.bf16.msra.mxu0 0
          %1743 = vmatprep.subr.bf16.mxu0 0
          %1744 = vmatpush2.bf16.msra.mxu0 0
          %1745 = vmatprep.subr.bf16.mxu0 0
          %1746 = vmatpush2.bf16.msra.mxu0 0
          %1747 = vmatprep.subr.bf16.mxu0 0
          %1748 = vmatpush2.bf16.msra.mxu0 0
          %1749 = vmatprep.mubr.bf16.mxu0 0
          %1750 = vmatmul.mubr.bf16.gmra.mxu0 %v1715
          %v1751 = vpop.f32.mrf.mxu0
          %v1752 = vadd.f32 0.0, %v1751
          %v1753 = vpop.f32.mrf.mxu0
          %v1754 = vpop.f32.mrf.mxu0
          %v1755 = vpop.f32.mrf.mxu0
          %1756 = vdwg.mxu0
          %1757 = vst [vmem:[%s709] sm:$0x1] %v1752
        $region96: #{tpu_custom_call.1} parent=87 // pred_fallthru
          _
        %s1758 = sand.u32 %s478, 1
        %s1759 = scalar_lea.sflag [#allocation4], %s1758
        %s1760 = sand.u32 %s478, 1
        %s1761 = scalar_lea.vmem [#allocation3], %s1760
        // Predicated region
        $region97: #{tpu_custom_call.1} parent=87 // pred_check
          %p1762 = pneg %p488
        $region98: #{tpu_custom_call.1} parent=87 // pred_check_branch
          %1764 = sbr.rel (%p1762) target = $region100
        $region99: #{tpu_custom_call.1} parent=87 // pred_region
          %s1766 = ssub.s32 16, 16
          %1767 = vsyncadd %s1759, %s1766
          %s1768 = smul.addr %s35, 16
          %s1769 = scalar_lea.hbm %s17, %s1768
          %s1771 = sshll.u32 %s1761, 4
          %s1772 = int_to_ptr.vmem [resolvable:$true] %s1771
          %1774 = dma.vmem_to_hbm [thread:$0]  %s1772, 16, %s1769, %s1759
        $region100: #{tpu_custom_call.1} parent=87 // pred_fallthru
          _
      $region88: #{tpu_custom_call.1} parent=5 // pred_fallthru
        _
      %p1775 = scmp.le.s32.totalorder 2, %s26
      // Predicated region
      $region101: #{tpu_custom_call.1} parent=5 // pred_check
        %p1776 = pneg %p1775
      $region102: #{tpu_custom_call.1} parent=5 // pred_check_branch
        %1778 = sbr.rel (%p1776) target = $region104
      $region103: #{tpu_custom_call.1} parent=5 // pred_region
        %s1779 = ssub.s32 %s26, 2
        // Predicated region
        $region105: #{tpu_custom_call.1} parent=103 // pred_check
          %p1780 = pneg %p494
        $region106: #{tpu_custom_call.1} parent=103 // pred_check_branch
          %1782 = sbr.rel (%p1780) target = $region108
        $region107: #{tpu_custom_call.1} parent=103 // pred_region
          %s1783 = sand.u32 %s479, 1
          %s1784 = scalar_lea.sflag [#allocation4], %s1783
          %s1785 = sand.u32 %s479, 1
          %s1786 = scalar_lea.vmem [#allocation3], %s1785
          %1787 = dma.done %s1784, 16
        $region108: #{tpu_custom_call.1} parent=103 // pred_fallthru
          _
      $region104: #{tpu_custom_call.1} parent=5 // pred_fallthru
        _
    $region6: #{tpu_custom_call.1} parent=1 // loop_footer
      %s30 = sadd.s32 1, %s26
    $region7: #{tpu_custom_call.1} parent=1 // loop_footer_branch
      %25 = sbr.rel target = $region3
    $region8: #{tpu_custom_call.1} parent=1 // loop_exit
      _
    %1788 = vsyncpa [#allocation4], 1
    %s1789 = scalar_lea.sflag [#allocation4], 1
    %1790 = vsyncpa %s1789, 1

</llo_original>
